<compile_context>
chip_gen: v5e
topology: v5e:2x2
jax: 0.10.0
libtpu: 0.0.40
codegen_flags: <defaults>
</compile_context>

<pallas_src>
import functools

import jax
import jax.numpy as jnp
import numpy as np
from jax import lax
from jax.experimental import pallas as pl
from jax.experimental.pallas import tpu as pltpu

GROUPS = 2
EPS = 1e-5


# ----------------------------------------------------------------------------
# Pallas kernel: full ResidualBlock forward for one batch element.
# ----------------------------------------------------------------------------
def residual_block_kernel(
    x_ref,      # (1, C, H*W)   activations, lane-dense, f32
    w1_ref,     # (9, C, C)     conv1 weight, bf16, [tap=3*ky+kx, o, i]
    w2_ref,     # (9, C, C)     conv2 weight, bf16
    vec_ref,    # (6, C, 1)     [b1; g1; bt1; b2; g2; bt2], f32
    mask_ref,   # (4, 1, H*W)   edge-mask basis: [row>0, row<H-1, col>0, col<W-1]
    o_ref,      # (1, C, H*W)
    *, H, W,
):
    _, C, HW = x_ref.shape
    half = C // GROUPS

    # Edge-mask basis vectors, (1, HW) each (0/1 in f32).
    row_m = {-1: mask_ref[0], 1: mask_ref[1]}
    col_m = {-1: mask_ref[2], 1: mask_ref[3]}

    # Group-membership mask built in-kernel (no captured constants).
    g0f = (lax.broadcasted_iota(jnp.int32, (C, 1), 0) < half).astype(jnp.float32)
    g1f = 1.0 - g0f

    def conv3x3(y, w_ref, b_col):
        # y: (C, HW) f32.  Nine accumulated (C,C)@(C,HW) MXU matmuls in bf16
        # with f32 accumulation; taps built from 2 generic lane rolls composed
        # with +/-W rolls, edge-masked so circular wrap contributes zero.
        base = {
            -1: pltpu.roll(y, shift=1, axis=1),        # needs x[col-1]
             0: y,
             1: pltpu.roll(y, shift=HW - 1, axis=1),   # needs x[col+1]
        }
        acc = jnp.zeros((C, HW), jnp.float32)
        for sy in (-1, 0, 1):
            for sx in (-1, 0, 1):
                t = base[sx]
                if sy != 0:
                    t = pltpu.roll(t, shift=(-sy * W) % HW, axis=1)
                m = None
                if sy != 0:
                    m = row_m[sy]
                if sx != 0:
                    m = col_m[sx] if m is None else m * col_m[sx]
                if m is not None:
                    t = t * m                          # f32 0/1 mask
                tap = (sy + 1) * 3 + (sx + 1)
                acc = acc + jnp.dot(w_ref[tap], t.astype(jnp.bfloat16),
                                    preferred_element_type=jnp.float32)
        return acc + b_col

    def groupnorm_silu(y, gamma, beta):
        # GroupNorm(2, C), biased variance, two-pass E[(x-mu)^2]; then SiLU.
        inv_n = 1.0 / (half * HW)
        ch_sum = jnp.sum(y, axis=1, keepdims=True)                 # (C, 1)
        s0 = jnp.sum(ch_sum * g0f, keepdims=True)                  # (1, 1)
        s1 = jnp.sum(ch_sum * g1f, keepdims=True)
        mu_c = g0f * (s0 * inv_n) + g1f * (s1 * inv_n)             # (C, 1)
        yc = y - mu_c
        ch_sq = jnp.sum(yc * yc, axis=1, keepdims=True)            # (C, 1)
        v0 = jnp.sum(ch_sq * g0f, keepdims=True) * inv_n
        v1 = jnp.sum(ch_sq * g1f, keepdims=True) * inv_n
        rs_c = g0f * lax.rsqrt(v0 + EPS) + g1f * lax.rsqrt(v1 + EPS)
        yn = yc * (rs_c * gamma) + beta
        return yn * jax.nn.sigmoid(yn)                             # SiLU

    x = x_ref[0].astype(jnp.float32)                               # (C, HW)
    b1, g1, bt1 = vec_ref[0], vec_ref[1], vec_ref[2]               # (C, 1) each
    b2, g2, bt2 = vec_ref[3], vec_ref[4], vec_ref[5]

    h = groupnorm_silu(conv3x3(x, w1_ref, b1), g1, bt1)
    h = groupnorm_silu(conv3x3(h, w2_ref, b2), g2, bt2)

    o_ref[0] = h.astype(o_ref.dtype)


# ----------------------------------------------------------------------------
# One-time parameter / constant packing (hoisted out of the per-call path)
# ----------------------------------------------------------------------------
def prepare_params(params, H, W):
    C = params["w1"].shape[0]
    HW = H * W

    def pack_w(w):  # (O, I, 3, 3) -> (9, O, I) bf16, tap = 3*ky + kx
        return jnp.transpose(w, (2, 3, 0, 1)).reshape(9, C, C).astype(jnp.bfloat16)

    vecs = jnp.stack([params["b1"], params["g1"], params["bt1"],
                      params["b2"], params["g2"], params["bt2"]],
                     axis=0).reshape(6, C, 1).astype(jnp.float32)

    pos = np.arange(HW)
    row, col = pos // W, pos % W
    basis = np.stack([row > 0, row < H - 1, col > 0, col < W - 1],
                     axis=0).astype(np.float32).reshape(4, 1, HW)

    return pack_w(params["w1"]), pack_w(params["w2"]), vecs, jnp.asarray(basis)


# ----------------------------------------------------------------------------
# Wrapper
# ----------------------------------------------------------------------------
def residual_block_pallas(x, packed):
    w1p, w2p, vecs, basis = packed
    N, C, H, W = x.shape
    HW = H * W
    x_flat = x.reshape(N, C, HW)                 # lane-dense layout (free, NCHW)

    # VMEM budget from actual block sizes + headroom for in-kernel temps.
    act = C * HW * 4                             # one (C, HW) f32 slab
    wts = 2 * 9 * C * C * 2                      # both bf16 weight packs
    est = 4 * act + 2 * wts + 12 * act + 4 * HW * 4 + 6 * C * 4
    vmem_limit = int(min(max(2 * est, 16 * 1024 * 1024), 52 * 1024 * 1024))

    cost = pl.CostEstimate(
        flops=N * 2 * 2 * C * (9 * C) * HW,              # two im2col matmuls
        transcendentals=N * 2 * C * HW,                  # sigmoid per GN+SiLU
        bytes_accessed=2 * N * C * HW * 4 + wts + 6 * C * 4 + 4 * HW * 4)

    kernel = functools.partial(residual_block_kernel, H=H, W=W)

    out_flat = pl.pallas_call(
        kernel,
        out_shape=jax.ShapeDtypeStruct((N, C, HW), x.dtype),
        grid=(N,),
        in_specs=[
            pl.BlockSpec((1, C, HW), lambda n: (n, 0, 0)),
            pl.BlockSpec((9, C, C), lambda n: (0, 0, 0)),
            pl.BlockSpec((9, C, C), lambda n: (0, 0, 0)),
            pl.BlockSpec((6, C, 1), lambda n: (0, 0, 0)),
            pl.BlockSpec((4, 1, HW), lambda n: (0, 0, 0)),
        ],
        out_specs=pl.BlockSpec((1, C, HW), lambda n: (n, 0, 0)),
        compiler_params=pltpu.CompilerParams(
            dimension_semantics=("parallel",),
            vmem_limit_bytes=vmem_limit),
        cost_estimate=cost,
    )(x_flat, w1p, w2p, vecs, basis)

    return out_flat.reshape(N, C, H, W)


# ----------------------------------------------------------------------------
# Pure-JAX reference (f32 throughout, matches the PyTorch module)
# ----------------------------------------------------------------------------
def residual_block_ref(x, params):
    def conv(x, w, b):
        y = lax.conv_general_dilated(
            x, w, window_strides=(1, 1), padding="SAME",
            dimension_numbers=("NCHW", "OIHW", "NCHW"))
        return y + b[None, :, None, None]

    def gn_silu(x, gamma, beta, groups=GROUPS, eps=EPS):
        N, C, H, W = x.shape
        xg = x.reshape(N, groups, C // groups, H, W)
        mu = xg.mean(axis=(2, 3, 4), keepdims=True)
        var = ((xg - mu) ** 2).mean(axis=(2, 3, 4), keepdims=True)
        xn = ((xg - mu) * lax.rsqrt(var + eps)).reshape(N, C, H, W)
        y = xn * gamma[None, :, None, None] + beta[None, :, None, None]
        return y * jax.nn.sigmoid(y)

    h = conv(x, params["w1"], params["b1"])
    h = gn_silu(h, params["g1"], params["bt1"])
    h = conv(h, params["w2"], params["b2"])
    h = gn_silu(h, params["g2"], params["bt2"])
    return h


# ----------------------------------------------------------------------------
# Deterministic parameter init (mimics nn.Conv2d / nn.GroupNorm shapes)
# ----------------------------------------------------------------------------
def make_params(key, channels):
    C = channels
    ks = jax.random.split(key, 8)
    bound = 1.0 / np.sqrt(C * 9)
    u = lambda k, s: jax.random.uniform(k, s, jnp.float32, -bound, bound)
    return {
        "w1": u(ks[0], (C, C, 3, 3)),
        "b1": u(ks[1], (C,)),
        "g1": 1.0 + 0.1 * jax.random.normal(ks[2], (C,), jnp.float32),
        "bt1": 0.1 * jax.random.normal(ks[3], (C,), jnp.float32),
        "w2": u(ks[4], (C, C, 3, 3)),
        "b2": u(ks[5], (C,)),
        "g2": 1.0 + 0.1 * jax.random.normal(ks[6], (C,), jnp.float32),
        "bt2": 0.1 * jax.random.normal(ks[7], (C,), jnp.float32),
    }


if __name__ == "__main__":
    N, C, H, W = 2, 4, 16, 16
    key = jax.random.PRNGKey(0)
    kx, kp = jax.random.split(key)
    x = jax.random.normal(kx, (N, C, H, W), jnp.float32)
    params = make_params(kp, C)
    packed = prepare_params(params, H, W)        # one-time weight/mask packing

    out = jax.block_until_ready(residual_block_pallas(x, packed))
    ref = jax.block_until_ready(residual_block_ref(x, params))

    # Tolerance reflects bf16 MXU operands vs the f32 PyTorch-equivalent ref
    # (GN stats and matmul accumulation are kept in f32 inside the kernel).
    np.testing.assert_allclose(np.asarray(out), np.asarray(ref),
                               rtol=5e-2, atol=5e-2)
    print("KERNEL_OK")
</pallas_src>

<mosaic_0001>
module attributes {stable_mosaic.version = 11 : i64} {
  func.func @residual_block_kernel(%arg0: i32, %arg1: memref<1x4x256xf32, #tpu.memory_space<vmem>>, %arg2: memref<9x4x4xbf16, #tpu.memory_space<vmem>>, %arg3: memref<9x4x4xbf16, #tpu.memory_space<vmem>>, %arg4: memref<6x4x1xf32, #tpu.memory_space<vmem>>, %arg5: memref<4x1x256xf32, #tpu.memory_space<vmem>>, %arg6: memref<1x4x256xf32, #tpu.memory_space<vmem>>) attributes {dimension_semantics = [#tpu.dimension_semantics<parallel>], iteration_bounds = array<i64: 2>, scalar_prefetch = 0 : i64, scratch_operands = 0 : i64, tpu.core_type = #tpu.core_type<tc>, window_params = [{transform_indices = @transform_0, window_bounds = array<i64: 1, 4, 256>}, {pipeline_mode = #tpu.pipeline_mode<synchronous>, transform_indices = @transform_1, window_bounds = array<i64: 9, 4, 4>}, {pipeline_mode = #tpu.pipeline_mode<synchronous>, transform_indices = @transform_2, window_bounds = array<i64: 9, 4, 4>}, {pipeline_mode = #tpu.pipeline_mode<synchronous>, transform_indices = @transform_3, window_bounds = array<i64: 6, 4, 1>}, {pipeline_mode = #tpu.pipeline_mode<synchronous>, transform_indices = @transform_4, window_bounds = array<i64: 4, 1, 256>}, {transform_indices = @transform_5, window_bounds = array<i64: 1, 4, 256>}]} {
    %c0 = arith.constant 0 : index
    %c0_0 = arith.constant 0 : index
    %c0_1 = arith.constant 0 : index
    %0 = vector.load %arg5[%c0, %c0_0, %c0_1] : memref<4x1x256xf32, #tpu.memory_space<vmem>>, vector<1x1x256xf32>
    %1 = vector.shape_cast %0 : vector<1x1x256xf32> to vector<1x256xf32>
    %c1 = arith.constant 1 : index
    %c0_2 = arith.constant 0 : index
    %c0_3 = arith.constant 0 : index
    %2 = vector.load %arg5[%c1, %c0_2, %c0_3] : memref<4x1x256xf32, #tpu.memory_space<vmem>>, vector<1x1x256xf32>
    %3 = vector.shape_cast %2 : vector<1x1x256xf32> to vector<1x256xf32>
    %c2 = arith.constant 2 : index
    %c0_4 = arith.constant 0 : index
    %c0_5 = arith.constant 0 : index
    %4 = vector.load %arg5[%c2, %c0_4, %c0_5] : memref<4x1x256xf32, #tpu.memory_space<vmem>>, vector<1x1x256xf32>
    %5 = vector.shape_cast %4 : vector<1x1x256xf32> to vector<1x256xf32>
    %c3 = arith.constant 3 : index
    %c0_6 = arith.constant 0 : index
    %c0_7 = arith.constant 0 : index
    %6 = vector.load %arg5[%c3, %c0_6, %c0_7] : memref<4x1x256xf32, #tpu.memory_space<vmem>>, vector<1x1x256xf32>
    %7 = vector.shape_cast %6 : vector<1x1x256xf32> to vector<1x256xf32>
    %8 = tpu.iota {dimensions = array<i32: 0>} : vector<4x1xi32>
    %c2_i32 = arith.constant 2 : i32
    %9 = vector.broadcast %c2_i32 : i32 to vector<4x1xi32>
    %10 = arith.cmpi slt, %8, %9 : vector<4x1xi32>
    %11 = arith.extui %10 : vector<4x1xi1> to vector<4x1xi32>
    %12 = arith.sitofp %11 : vector<4x1xi32> to vector<4x1xf32>
    %cst = arith.constant 1.000000e+00 : f32
    %13 = vector.broadcast %cst : f32 to vector<4x1xf32>
    %14 = arith.subf %13, %12 : vector<4x1xf32>
    %c0_8 = arith.constant 0 : index
    %c0_9 = arith.constant 0 : index
    %c0_10 = arith.constant 0 : index
    %15 = vector.load %arg1[%c0_8, %c0_9, %c0_10] : memref<1x4x256xf32, #tpu.memory_space<vmem>>, vector<1x4x256xf32>
    %16 = vector.shape_cast %15 : vector<1x4x256xf32> to vector<4x256xf32>
    %c0_11 = arith.constant 0 : index
    %c0_12 = arith.constant 0 : index
    %c0_13 = arith.constant 0 : index
    %17 = vector.load %arg4[%c0_11, %c0_12, %c0_13] : memref<6x4x1xf32, #tpu.memory_space<vmem>>, vector<1x4x1xf32>
    %18 = vector.shape_cast %17 : vector<1x4x1xf32> to vector<4x1xf32>
    %c1_14 = arith.constant 1 : index
    %c0_15 = arith.constant 0 : index
    %c0_16 = arith.constant 0 : index
    %19 = vector.load %arg4[%c1_14, %c0_15, %c0_16] : memref<6x4x1xf32, #tpu.memory_space<vmem>>, vector<1x4x1xf32>
    %20 = vector.shape_cast %19 : vector<1x4x1xf32> to vector<4x1xf32>
    %c2_17 = arith.constant 2 : index
    %c0_18 = arith.constant 0 : index
    %c0_19 = arith.constant 0 : index
    %21 = vector.load %arg4[%c2_17, %c0_18, %c0_19] : memref<6x4x1xf32, #tpu.memory_space<vmem>>, vector<1x4x1xf32>
    %22 = vector.shape_cast %21 : vector<1x4x1xf32> to vector<4x1xf32>
    %c3_20 = arith.constant 3 : index
    %c0_21 = arith.constant 0 : index
    %c0_22 = arith.constant 0 : index
    %23 = vector.load %arg4[%c3_20, %c0_21, %c0_22] : memref<6x4x1xf32, #tpu.memory_space<vmem>>, vector<1x4x1xf32>
    %24 = vector.shape_cast %23 : vector<1x4x1xf32> to vector<4x1xf32>
    %c4 = arith.constant 4 : index
    %c0_23 = arith.constant 0 : index
    %c0_24 = arith.constant 0 : index
    %25 = vector.load %arg4[%c4, %c0_23, %c0_24] : memref<6x4x1xf32, #tpu.memory_space<vmem>>, vector<1x4x1xf32>
    %26 = vector.shape_cast %25 : vector<1x4x1xf32> to vector<4x1xf32>
    %c5 = arith.constant 5 : index
    %c0_25 = arith.constant 0 : index
    %c0_26 = arith.constant 0 : index
    %27 = vector.load %arg4[%c5, %c0_25, %c0_26] : memref<6x4x1xf32, #tpu.memory_space<vmem>>, vector<1x4x1xf32>
    %28 = vector.shape_cast %27 : vector<1x4x1xf32> to vector<4x1xf32>
    %c1_i32 = arith.constant 1 : i32
    %29 = tpu.dynamic_rotate %16 by %c1_i32 dim 1 : vector<4x256xf32>, i32 -> vector<4x256xf32>
    %c255_i32 = arith.constant 255 : i32
    %30 = tpu.dynamic_rotate %16 by %c255_i32 dim 1 : vector<4x256xf32>, i32 -> vector<4x256xf32>
    %cst_27 = arith.constant 0.000000e+00 : f32
    %31 = vector.broadcast %cst_27 : f32 to vector<4x256xf32>
    %c16_i32 = arith.constant 16 : i32
    %32 = tpu.dynamic_rotate %29 by %c16_i32 dim 1 : vector<4x256xf32>, i32 -> vector<4x256xf32>
    %33 = arith.mulf %1, %5 : vector<1x256xf32>
    %34 = vector.broadcast %33 : vector<1x256xf32> to vector<4x256xf32>
    %35 = arith.mulf %32, %34 : vector<4x256xf32>
    %c0_28 = arith.constant 0 : index
    %c0_29 = arith.constant 0 : index
    %c0_30 = arith.constant 0 : index
    %36 = vector.load %arg2[%c0_28, %c0_29, %c0_30] : memref<9x4x4xbf16, #tpu.memory_space<vmem>>, vector<1x4x4xbf16>
    %37 = vector.shape_cast %36 : vector<1x4x4xbf16> to vector<4x4xbf16>
    %38 = arith.truncf %35 : vector<4x256xf32> to vector<4x256xbf16>
    %cst_31 = arith.constant dense<0.000000e+00> : vector<4x256xf32>
    %39 = tpu.matmul %37, %38, %cst_31 {dimension_numbers = #tpu.dot_dimension_numbers<[1], [0], [0], [1], [0, 0, 1, 1], [], []>} : vector<4x4xbf16>, vector<4x256xbf16>, vector<4x256xf32> -> vector<4x256xf32>
    %40 = arith.addf %31, %39 : vector<4x256xf32>
    %c16_i32_32 = arith.constant 16 : i32
    %41 = tpu.dynamic_rotate %16 by %c16_i32_32 dim 1 : vector<4x256xf32>, i32 -> vector<4x256xf32>
    %42 = vector.broadcast %1 : vector<1x256xf32> to vector<4x256xf32>
    %43 = arith.mulf %41, %42 : vector<4x256xf32>
    %c1_33 = arith.constant 1 : index
    %c0_34 = arith.constant 0 : index
    %c0_35 = arith.constant 0 : index
    %44 = vector.load %arg2[%c1_33, %c0_34, %c0_35] : memref<9x4x4xbf16, #tpu.memory_space<vmem>>, vector<1x4x4xbf16>
    %45 = vector.shape_cast %44 : vector<1x4x4xbf16> to vector<4x4xbf16>
    %46 = arith.truncf %43 : vector<4x256xf32> to vector<4x256xbf16>
    %cst_36 = arith.constant dense<0.000000e+00> : vector<4x256xf32>
    %47 = tpu.matmul %45, %46, %cst_36 {dimension_numbers = #tpu.dot_dimension_numbers<[1], [0], [0], [1], [0, 0, 1, 1], [], []>} : vector<4x4xbf16>, vector<4x256xbf16>, vector<4x256xf32> -> vector<4x256xf32>
    %48 = arith.addf %40, %47 : vector<4x256xf32>
    %c16_i32_37 = arith.constant 16 : i32
    %49 = tpu.dynamic_rotate %30 by %c16_i32_37 dim 1 : vector<4x256xf32>, i32 -> vector<4x256xf32>
    %50 = arith.mulf %1, %7 : vector<1x256xf32>
    %51 = vector.broadcast %50 : vector<1x256xf32> to vector<4x256xf32>
    %52 = arith.mulf %49, %51 : vector<4x256xf32>
    %c2_38 = arith.constant 2 : index
    %c0_39 = arith.constant 0 : index
    %c0_40 = arith.constant 0 : index
    %53 = vector.load %arg2[%c2_38, %c0_39, %c0_40] : memref<9x4x4xbf16, #tpu.memory_space<vmem>>, vector<1x4x4xbf16>
    %54 = vector.shape_cast %53 : vector<1x4x4xbf16> to vector<4x4xbf16>
    %55 = arith.truncf %52 : vector<4x256xf32> to vector<4x256xbf16>
    %cst_41 = arith.constant dense<0.000000e+00> : vector<4x256xf32>
    %56 = tpu.matmul %54, %55, %cst_41 {dimension_numbers = #tpu.dot_dimension_numbers<[1], [0], [0], [1], [0, 0, 1, 1], [], []>} : vector<4x4xbf16>, vector<4x256xbf16>, vector<4x256xf32> -> vector<4x256xf32>
    %57 = arith.addf %48, %56 : vector<4x256xf32>
    %58 = vector.broadcast %5 : vector<1x256xf32> to vector<4x256xf32>
    %59 = arith.mulf %29, %58 : vector<4x256xf32>
    %c3_42 = arith.constant 3 : index
    %c0_43 = arith.constant 0 : index
    %c0_44 = arith.constant 0 : index
    %60 = vector.load %arg2[%c3_42, %c0_43, %c0_44] : memref<9x4x4xbf16, #tpu.memory_space<vmem>>, vector<1x4x4xbf16>
    %61 = vector.shape_cast %60 : vector<1x4x4xbf16> to vector<4x4xbf16>
    %62 = arith.truncf %59 : vector<4x256xf32> to vector<4x256xbf16>
    %cst_45 = arith.constant dense<0.000000e+00> : vector<4x256xf32>
    %63 = tpu.matmul %61, %62, %cst_45 {dimension_numbers = #tpu.dot_dimension_numbers<[1], [0], [0], [1], [0, 0, 1, 1], [], []>} : vector<4x4xbf16>, vector<4x256xbf16>, vector<4x256xf32> -> vector<4x256xf32>
    %64 = arith.addf %57, %63 : vector<4x256xf32>
    %c4_46 = arith.constant 4 : index
    %c0_47 = arith.constant 0 : index
    %c0_48 = arith.constant 0 : index
    %65 = vector.load %arg2[%c4_46, %c0_47, %c0_48] : memref<9x4x4xbf16, #tpu.memory_space<vmem>>, vector<1x4x4xbf16>
    %66 = vector.shape_cast %65 : vector<1x4x4xbf16> to vector<4x4xbf16>
    %67 = arith.truncf %16 : vector<4x256xf32> to vector<4x256xbf16>
    %cst_49 = arith.constant dense<0.000000e+00> : vector<4x256xf32>
    %68 = tpu.matmul %66, %67, %cst_49 {dimension_numbers = #tpu.dot_dimension_numbers<[1], [0], [0], [1], [0, 0, 1, 1], [], []>} : vector<4x4xbf16>, vector<4x256xbf16>, vector<4x256xf32> -> vector<4x256xf32>
    %69 = arith.addf %64, %68 : vector<4x256xf32>
    %70 = vector.broadcast %7 : vector<1x256xf32> to vector<4x256xf32>
    %71 = arith.mulf %30, %70 : vector<4x256xf32>
    %c5_50 = arith.constant 5 : index
    %c0_51 = arith.constant 0 : index
    %c0_52 = arith.constant 0 : index
    %72 = vector.load %arg2[%c5_50, %c0_51, %c0_52] : memref<9x4x4xbf16, #tpu.memory_space<vmem>>, vector<1x4x4xbf16>
    %73 = vector.shape_cast %72 : vector<1x4x4xbf16> to vector<4x4xbf16>
    %74 = arith.truncf %71 : vector<4x256xf32> to vector<4x256xbf16>
    %cst_53 = arith.constant dense<0.000000e+00> : vector<4x256xf32>
    %75 = tpu.matmul %73, %74, %cst_53 {dimension_numbers = #tpu.dot_dimension_numbers<[1], [0], [0], [1], [0, 0, 1, 1], [], []>} : vector<4x4xbf16>, vector<4x256xbf16>, vector<4x256xf32> -> vector<4x256xf32>
    %76 = arith.addf %69, %75 : vector<4x256xf32>
    %c240_i32 = arith.constant 240 : i32
    %77 = tpu.dynamic_rotate %29 by %c240_i32 dim 1 : vector<4x256xf32>, i32 -> vector<4x256xf32>
    %78 = arith.mulf %3, %5 : vector<1x256xf32>
    %79 = vector.broadcast %78 : vector<1x256xf32> to vector<4x256xf32>
    %80 = arith.mulf %77, %79 : vector<4x256xf32>
    %c6 = arith.constant 6 : index
    %c0_54 = arith.constant 0 : index
    %c0_55 = arith.constant 0 : index
    %81 = vector.load %arg2[%c6, %c0_54, %c0_55] : memref<9x4x4xbf16, #tpu.memory_space<vmem>>, vector<1x4x4xbf16>
    %82 = vector.shape_cast %81 : vector<1x4x4xbf16> to vector<4x4xbf16>
    %83 = arith.truncf %80 : vector<4x256xf32> to vector<4x256xbf16>
    %cst_56 = arith.constant dense<0.000000e+00> : vector<4x256xf32>
    %84 = tpu.matmul %82, %83, %cst_56 {dimension_numbers = #tpu.dot_dimension_numbers<[1], [0], [0], [1], [0, 0, 1, 1], [], []>} : vector<4x4xbf16>, vector<4x256xbf16>, vector<4x256xf32> -> vector<4x256xf32>
    %85 = arith.addf %76, %84 : vector<4x256xf32>
    %c240_i32_57 = arith.constant 240 : i32
    %86 = tpu.dynamic_rotate %16 by %c240_i32_57 dim 1 : vector<4x256xf32>, i32 -> vector<4x256xf32>
    %87 = vector.broadcast %3 : vector<1x256xf32> to vector<4x256xf32>
    %88 = arith.mulf %86, %87 : vector<4x256xf32>
    %c7 = arith.constant 7 : index
    %c0_58 = arith.constant 0 : index
    %c0_59 = arith.constant 0 : index
    %89 = vector.load %arg2[%c7, %c0_58, %c0_59] : memref<9x4x4xbf16, #tpu.memory_space<vmem>>, vector<1x4x4xbf16>
    %90 = vector.shape_cast %89 : vector<1x4x4xbf16> to vector<4x4xbf16>
    %91 = arith.truncf %88 : vector<4x256xf32> to vector<4x256xbf16>
    %cst_60 = arith.constant dense<0.000000e+00> : vector<4x256xf32>
    %92 = tpu.matmul %90, %91, %cst_60 {dimension_numbers = #tpu.dot_dimension_numbers<[1], [0], [0], [1], [0, 0, 1, 1], [], []>} : vector<4x4xbf16>, vector<4x256xbf16>, vector<4x256xf32> -> vector<4x256xf32>
    %93 = arith.addf %85, %92 : vector<4x256xf32>
    %c240_i32_61 = arith.constant 240 : i32
    %94 = tpu.dynamic_rotate %30 by %c240_i32_61 dim 1 : vector<4x256xf32>, i32 -> vector<4x256xf32>
    %95 = arith.mulf %3, %7 : vector<1x256xf32>
    %96 = vector.broadcast %95 : vector<1x256xf32> to vector<4x256xf32>
    %97 = arith.mulf %94, %96 : vector<4x256xf32>
    %c8 = arith.constant 8 : index
    %c0_62 = arith.constant 0 : index
    %c0_63 = arith.constant 0 : index
    %98 = vector.load %arg2[%c8, %c0_62, %c0_63] : memref<9x4x4xbf16, #tpu.memory_space<vmem>>, vector<1x4x4xbf16>
    %99 = vector.shape_cast %98 : vector<1x4x4xbf16> to vector<4x4xbf16>
    %100 = arith.truncf %97 : vector<4x256xf32> to vector<4x256xbf16>
    %cst_64 = arith.constant dense<0.000000e+00> : vector<4x256xf32>
    %101 = tpu.matmul %99, %100, %cst_64 {dimension_numbers = #tpu.dot_dimension_numbers<[1], [0], [0], [1], [0, 0, 1, 1], [], []>} : vector<4x4xbf16>, vector<4x256xbf16>, vector<4x256xf32> -> vector<4x256xf32>
    %102 = arith.addf %93, %101 : vector<4x256xf32>
    %103 = vector.broadcast %18 : vector<4x1xf32> to vector<4x256xf32>
    %104 = arith.addf %102, %103 : vector<4x256xf32>
    %cst_65 = arith.constant dense<0.000000e+00> : vector<4xf32>
    %105 = vector.multi_reduction <add>, %104, %cst_65 [1] : vector<4x256xf32> to vector<4xf32>
    %106 = vector.shape_cast %105 : vector<4xf32> to vector<4x1xf32>
    %107 = arith.mulf %106, %12 : vector<4x1xf32>
    %108 = vector.shape_cast %107 : vector<4x1xf32> to vector<1x4x1xf32>
    %cst_66 = arith.constant dense<0.000000e+00> : vector<1xf32>
    %109 = vector.multi_reduction <add>, %108, %cst_66 [1, 2] : vector<1x4x1xf32> to vector<1xf32>
    %110 = vector.shape_cast %109 : vector<1xf32> to vector<1x1x1xf32>
    %111 = vector.extract %110[0, 0, 0] : f32 from vector<1x1x1xf32>
    %112 = vector.broadcast %111 : f32 to vector<1x1xf32>
    %113 = arith.mulf %106, %14 : vector<4x1xf32>
    %114 = vector.shape_cast %113 : vector<4x1xf32> to vector<1x4x1xf32>
    %cst_67 = arith.constant dense<0.000000e+00> : vector<1xf32>
    %115 = vector.multi_reduction <add>, %114, %cst_67 [1, 2] : vector<1x4x1xf32> to vector<1xf32>
    %116 = vector.shape_cast %115 : vector<1xf32> to vector<1x1x1xf32>
    %117 = vector.extract %116[0, 0, 0] : f32 from vector<1x1x1xf32>
    %118 = vector.broadcast %117 : f32 to vector<1x1xf32>
    %cst_68 = arith.constant 0.001953125 : f32
    %119 = vector.broadcast %cst_68 : f32 to vector<1x1xf32>
    %120 = arith.mulf %112, %119 : vector<1x1xf32>
    %121 = vector.broadcast %120 : vector<1x1xf32> to vector<4x1xf32>
    %122 = arith.mulf %12, %121 : vector<4x1xf32>
    %cst_69 = arith.constant 0.001953125 : f32
    %123 = vector.broadcast %cst_69 : f32 to vector<1x1xf32>
    %124 = arith.mulf %118, %123 : vector<1x1xf32>
    %125 = vector.broadcast %124 : vector<1x1xf32> to vector<4x1xf32>
    %126 = arith.mulf %14, %125 : vector<4x1xf32>
    %127 = arith.addf %122, %126 : vector<4x1xf32>
    %128 = vector.broadcast %127 : vector<4x1xf32> to vector<4x256xf32>
    %129 = arith.subf %104, %128 : vector<4x256xf32>
    %130 = arith.mulf %129, %129 : vector<4x256xf32>
    %cst_70 = arith.constant dense<0.000000e+00> : vector<4xf32>
    %131 = vector.multi_reduction <add>, %130, %cst_70 [1] : vector<4x256xf32> to vector<4xf32>
    %132 = vector.shape_cast %131 : vector<4xf32> to vector<4x1xf32>
    %133 = arith.mulf %132, %12 : vector<4x1xf32>
    %134 = vector.shape_cast %133 : vector<4x1xf32> to vector<1x4x1xf32>
    %cst_71 = arith.constant dense<0.000000e+00> : vector<1xf32>
    %135 = vector.multi_reduction <add>, %134, %cst_71 [1, 2] : vector<1x4x1xf32> to vector<1xf32>
    %136 = vector.shape_cast %135 : vector<1xf32> to vector<1x1x1xf32>
    %137 = vector.extract %136[0, 0, 0] : f32 from vector<1x1x1xf32>
    %138 = vector.broadcast %137 : f32 to vector<1x1xf32>
    %cst_72 = arith.constant 0.001953125 : f32
    %139 = vector.broadcast %cst_72 : f32 to vector<1x1xf32>
    %140 = arith.mulf %138, %139 : vector<1x1xf32>
    %141 = arith.mulf %132, %14 : vector<4x1xf32>
    %142 = vector.shape_cast %141 : vector<4x1xf32> to vector<1x4x1xf32>
    %cst_73 = arith.constant dense<0.000000e+00> : vector<1xf32>
    %143 = vector.multi_reduction <add>, %142, %cst_73 [1, 2] : vector<1x4x1xf32> to vector<1xf32>
    %144 = vector.shape_cast %143 : vector<1xf32> to vector<1x1x1xf32>
    %145 = vector.extract %144[0, 0, 0] : f32 from vector<1x1x1xf32>
    %146 = vector.broadcast %145 : f32 to vector<1x1xf32>
    %cst_74 = arith.constant 0.001953125 : f32
    %147 = vector.broadcast %cst_74 : f32 to vector<1x1xf32>
    %148 = arith.mulf %146, %147 : vector<1x1xf32>
    %cst_75 = arith.constant 9.99999974E-6 : f32
    %149 = vector.broadcast %cst_75 : f32 to vector<1x1xf32>
    %150 = arith.addf %140, %149 : vector<1x1xf32>
    %151 = math.rsqrt %150 : vector<1x1xf32>
    %152 = vector.broadcast %151 : vector<1x1xf32> to vector<4x1xf32>
    %153 = arith.mulf %12, %152 : vector<4x1xf32>
    %cst_76 = arith.constant 9.99999974E-6 : f32
    %154 = vector.broadcast %cst_76 : f32 to vector<1x1xf32>
    %155 = arith.addf %148, %154 : vector<1x1xf32>
    %156 = math.rsqrt %155 : vector<1x1xf32>
    %157 = vector.broadcast %156 : vector<1x1xf32> to vector<4x1xf32>
    %158 = arith.mulf %14, %157 : vector<4x1xf32>
    %159 = arith.addf %153, %158 : vector<4x1xf32>
    %160 = arith.mulf %159, %20 : vector<4x1xf32>
    %161 = vector.broadcast %160 : vector<4x1xf32> to vector<4x256xf32>
    %162 = arith.mulf %129, %161 : vector<4x256xf32>
    %163 = vector.broadcast %22 : vector<4x1xf32> to vector<4x256xf32>
    %164 = arith.addf %162, %163 : vector<4x256xf32>
    %165 = arith.negf %164 : vector<4x256xf32>
    %166 = math.exp %165 : vector<4x256xf32>
    %cst_77 = arith.constant 1.000000e+00 : f32
    %167 = vector.broadcast %cst_77 : f32 to vector<4x256xf32>
    %168 = arith.addf %167, %166 : vector<4x256xf32>
    %169 = arith.divf %167, %168 : vector<4x256xf32>
    %170 = arith.mulf %164, %169 : vector<4x256xf32>
    %c1_i32_78 = arith.constant 1 : i32
    %171 = tpu.dynamic_rotate %170 by %c1_i32_78 dim 1 : vector<4x256xf32>, i32 -> vector<4x256xf32>
    %c255_i32_79 = arith.constant 255 : i32
    %172 = tpu.dynamic_rotate %170 by %c255_i32_79 dim 1 : vector<4x256xf32>, i32 -> vector<4x256xf32>
    %cst_80 = arith.constant 0.000000e+00 : f32
    %173 = vector.broadcast %cst_80 : f32 to vector<4x256xf32>
    %c16_i32_81 = arith.constant 16 : i32
    %174 = tpu.dynamic_rotate %171 by %c16_i32_81 dim 1 : vector<4x256xf32>, i32 -> vector<4x256xf32>
    %175 = arith.mulf %1, %5 : vector<1x256xf32>
    %176 = vector.broadcast %175 : vector<1x256xf32> to vector<4x256xf32>
    %177 = arith.mulf %174, %176 : vector<4x256xf32>
    %c0_82 = arith.constant 0 : index
    %c0_83 = arith.constant 0 : index
    %c0_84 = arith.constant 0 : index
    %178 = vector.load %arg3[%c0_82, %c0_83, %c0_84] : memref<9x4x4xbf16, #tpu.memory_space<vmem>>, vector<1x4x4xbf16>
    %179 = vector.shape_cast %178 : vector<1x4x4xbf16> to vector<4x4xbf16>
    %180 = arith.truncf %177 : vector<4x256xf32> to vector<4x256xbf16>
    %cst_85 = arith.constant dense<0.000000e+00> : vector<4x256xf32>
    %181 = tpu.matmul %179, %180, %cst_85 {dimension_numbers = #tpu.dot_dimension_numbers<[1], [0], [0], [1], [0, 0, 1, 1], [], []>} : vector<4x4xbf16>, vector<4x256xbf16>, vector<4x256xf32> -> vector<4x256xf32>
    %182 = arith.addf %173, %181 : vector<4x256xf32>
    %c16_i32_86 = arith.constant 16 : i32
    %183 = tpu.dynamic_rotate %170 by %c16_i32_86 dim 1 : vector<4x256xf32>, i32 -> vector<4x256xf32>
    %184 = vector.broadcast %1 : vector<1x256xf32> to vector<4x256xf32>
    %185 = arith.mulf %183, %184 : vector<4x256xf32>
    %c1_87 = arith.constant 1 : index
    %c0_88 = arith.constant 0 : index
    %c0_89 = arith.constant 0 : index
    %186 = vector.load %arg3[%c1_87, %c0_88, %c0_89] : memref<9x4x4xbf16, #tpu.memory_space<vmem>>, vector<1x4x4xbf16>
    %187 = vector.shape_cast %186 : vector<1x4x4xbf16> to vector<4x4xbf16>
    %188 = arith.truncf %185 : vector<4x256xf32> to vector<4x256xbf16>
    %cst_90 = arith.constant dense<0.000000e+00> : vector<4x256xf32>
    %189 = tpu.matmul %187, %188, %cst_90 {dimension_numbers = #tpu.dot_dimension_numbers<[1], [0], [0], [1], [0, 0, 1, 1], [], []>} : vector<4x4xbf16>, vector<4x256xbf16>, vector<4x256xf32> -> vector<4x256xf32>
    %190 = arith.addf %182, %189 : vector<4x256xf32>
    %c16_i32_91 = arith.constant 16 : i32
    %191 = tpu.dynamic_rotate %172 by %c16_i32_91 dim 1 : vector<4x256xf32>, i32 -> vector<4x256xf32>
    %192 = arith.mulf %1, %7 : vector<1x256xf32>
    %193 = vector.broadcast %192 : vector<1x256xf32> to vector<4x256xf32>
    %194 = arith.mulf %191, %193 : vector<4x256xf32>
    %c2_92 = arith.constant 2 : index
    %c0_93 = arith.constant 0 : index
    %c0_94 = arith.constant 0 : index
    %195 = vector.load %arg3[%c2_92, %c0_93, %c0_94] : memref<9x4x4xbf16, #tpu.memory_space<vmem>>, vector<1x4x4xbf16>
    %196 = vector.shape_cast %195 : vector<1x4x4xbf16> to vector<4x4xbf16>
    %197 = arith.truncf %194 : vector<4x256xf32> to vector<4x256xbf16>
    %cst_95 = arith.constant dense<0.000000e+00> : vector<4x256xf32>
    %198 = tpu.matmul %196, %197, %cst_95 {dimension_numbers = #tpu.dot_dimension_numbers<[1], [0], [0], [1], [0, 0, 1, 1], [], []>} : vector<4x4xbf16>, vector<4x256xbf16>, vector<4x256xf32> -> vector<4x256xf32>
    %199 = arith.addf %190, %198 : vector<4x256xf32>
    %200 = vector.broadcast %5 : vector<1x256xf32> to vector<4x256xf32>
    %201 = arith.mulf %171, %200 : vector<4x256xf32>
    %c3_96 = arith.constant 3 : index
    %c0_97 = arith.constant 0 : index
    %c0_98 = arith.constant 0 : index
    %202 = vector.load %arg3[%c3_96, %c0_97, %c0_98] : memref<9x4x4xbf16, #tpu.memory_space<vmem>>, vector<1x4x4xbf16>
    %203 = vector.shape_cast %202 : vector<1x4x4xbf16> to vector<4x4xbf16>
    %204 = arith.truncf %201 : vector<4x256xf32> to vector<4x256xbf16>
    %cst_99 = arith.constant dense<0.000000e+00> : vector<4x256xf32>
    %205 = tpu.matmul %203, %204, %cst_99 {dimension_numbers = #tpu.dot_dimension_numbers<[1], [0], [0], [1], [0, 0, 1, 1], [], []>} : vector<4x4xbf16>, vector<4x256xbf16>, vector<4x256xf32> -> vector<4x256xf32>
    %206 = arith.addf %199, %205 : vector<4x256xf32>
    %c4_100 = arith.constant 4 : index
    %c0_101 = arith.constant 0 : index
    %c0_102 = arith.constant 0 : index
    %207 = vector.load %arg3[%c4_100, %c0_101, %c0_102] : memref<9x4x4xbf16, #tpu.memory_space<vmem>>, vector<1x4x4xbf16>
    %208 = vector.shape_cast %207 : vector<1x4x4xbf16> to vector<4x4xbf16>
    %209 = arith.truncf %170 : vector<4x256xf32> to vector<4x256xbf16>
    %cst_103 = arith.constant dense<0.000000e+00> : vector<4x256xf32>
    %210 = tpu.matmul %208, %209, %cst_103 {dimension_numbers = #tpu.dot_dimension_numbers<[1], [0], [0], [1], [0, 0, 1, 1], [], []>} : vector<4x4xbf16>, vector<4x256xbf16>, vector<4x256xf32> -> vector<4x256xf32>
    %211 = arith.addf %206, %210 : vector<4x256xf32>
    %212 = vector.broadcast %7 : vector<1x256xf32> to vector<4x256xf32>
    %213 = arith.mulf %172, %212 : vector<4x256xf32>
    %c5_104 = arith.constant 5 : index
    %c0_105 = arith.constant 0 : index
    %c0_106 = arith.constant 0 : index
    %214 = vector.load %arg3[%c5_104, %c0_105, %c0_106] : memref<9x4x4xbf16, #tpu.memory_space<vmem>>, vector<1x4x4xbf16>
    %215 = vector.shape_cast %214 : vector<1x4x4xbf16> to vector<4x4xbf16>
    %216 = arith.truncf %213 : vector<4x256xf32> to vector<4x256xbf16>
    %cst_107 = arith.constant dense<0.000000e+00> : vector<4x256xf32>
    %217 = tpu.matmul %215, %216, %cst_107 {dimension_numbers = #tpu.dot_dimension_numbers<[1], [0], [0], [1], [0, 0, 1, 1], [], []>} : vector<4x4xbf16>, vector<4x256xbf16>, vector<4x256xf32> -> vector<4x256xf32>
    %218 = arith.addf %211, %217 : vector<4x256xf32>
    %c240_i32_108 = arith.constant 240 : i32
    %219 = tpu.dynamic_rotate %171 by %c240_i32_108 dim 1 : vector<4x256xf32>, i32 -> vector<4x256xf32>
    %220 = arith.mulf %3, %5 : vector<1x256xf32>
    %221 = vector.broadcast %220 : vector<1x256xf32> to vector<4x256xf32>
    %222 = arith.mulf %219, %221 : vector<4x256xf32>
    %c6_109 = arith.constant 6 : index
    %c0_110 = arith.constant 0 : index
    %c0_111 = arith.constant 0 : index
    %223 = vector.load %arg3[%c6_109, %c0_110, %c0_111] : memref<9x4x4xbf16, #tpu.memory_space<vmem>>, vector<1x4x4xbf16>
    %224 = vector.shape_cast %223 : vector<1x4x4xbf16> to vector<4x4xbf16>
    %225 = arith.truncf %222 : vector<4x256xf32> to vector<4x256xbf16>
    %cst_112 = arith.constant dense<0.000000e+00> : vector<4x256xf32>
    %226 = tpu.matmul %224, %225, %cst_112 {dimension_numbers = #tpu.dot_dimension_numbers<[1], [0], [0], [1], [0, 0, 1, 1], [], []>} : vector<4x4xbf16>, vector<4x256xbf16>, vector<4x256xf32> -> vector<4x256xf32>
    %227 = arith.addf %218, %226 : vector<4x256xf32>
    %c240_i32_113 = arith.constant 240 : i32
    %228 = tpu.dynamic_rotate %170 by %c240_i32_113 dim 1 : vector<4x256xf32>, i32 -> vector<4x256xf32>
    %229 = vector.broadcast %3 : vector<1x256xf32> to vector<4x256xf32>
    %230 = arith.mulf %228, %229 : vector<4x256xf32>
    %c7_114 = arith.constant 7 : index
    %c0_115 = arith.constant 0 : index
    %c0_116 = arith.constant 0 : index
    %231 = vector.load %arg3[%c7_114, %c0_115, %c0_116] : memref<9x4x4xbf16, #tpu.memory_space<vmem>>, vector<1x4x4xbf16>
    %232 = vector.shape_cast %231 : vector<1x4x4xbf16> to vector<4x4xbf16>
    %233 = arith.truncf %230 : vector<4x256xf32> to vector<4x256xbf16>
    %cst_117 = arith.constant dense<0.000000e+00> : vector<4x256xf32>
    %234 = tpu.matmul %232, %233, %cst_117 {dimension_numbers = #tpu.dot_dimension_numbers<[1], [0], [0], [1], [0, 0, 1, 1], [], []>} : vector<4x4xbf16>, vector<4x256xbf16>, vector<4x256xf32> -> vector<4x256xf32>
    %235 = arith.addf %227, %234 : vector<4x256xf32>
    %c240_i32_118 = arith.constant 240 : i32
    %236 = tpu.dynamic_rotate %172 by %c240_i32_118 dim 1 : vector<4x256xf32>, i32 -> vector<4x256xf32>
    %237 = arith.mulf %3, %7 : vector<1x256xf32>
    %238 = vector.broadcast %237 : vector<1x256xf32> to vector<4x256xf32>
    %239 = arith.mulf %236, %238 : vector<4x256xf32>
    %c8_119 = arith.constant 8 : index
    %c0_120 = arith.constant 0 : index
    %c0_121 = arith.constant 0 : index
    %240 = vector.load %arg3[%c8_119, %c0_120, %c0_121] : memref<9x4x4xbf16, #tpu.memory_space<vmem>>, vector<1x4x4xbf16>
    %241 = vector.shape_cast %240 : vector<1x4x4xbf16> to vector<4x4xbf16>
    %242 = arith.truncf %239 : vector<4x256xf32> to vector<4x256xbf16>
    %cst_122 = arith.constant dense<0.000000e+00> : vector<4x256xf32>
    %243 = tpu.matmul %241, %242, %cst_122 {dimension_numbers = #tpu.dot_dimension_numbers<[1], [0], [0], [1], [0, 0, 1, 1], [], []>} : vector<4x4xbf16>, vector<4x256xbf16>, vector<4x256xf32> -> vector<4x256xf32>
    %244 = arith.addf %235, %243 : vector<4x256xf32>
    %245 = vector.broadcast %24 : vector<4x1xf32> to vector<4x256xf32>
    %246 = arith.addf %244, %245 : vector<4x256xf32>
    %cst_123 = arith.constant dense<0.000000e+00> : vector<4xf32>
    %247 = vector.multi_reduction <add>, %246, %cst_123 [1] : vector<4x256xf32> to vector<4xf32>
    %248 = vector.shape_cast %247 : vector<4xf32> to vector<4x1xf32>
    %249 = arith.mulf %248, %12 : vector<4x1xf32>
    %250 = vector.shape_cast %249 : vector<4x1xf32> to vector<1x4x1xf32>
    %cst_124 = arith.constant dense<0.000000e+00> : vector<1xf32>
    %251 = vector.multi_reduction <add>, %250, %cst_124 [1, 2] : vector<1x4x1xf32> to vector<1xf32>
    %252 = vector.shape_cast %251 : vector<1xf32> to vector<1x1x1xf32>
    %253 = vector.extract %252[0, 0, 0] : f32 from vector<1x1x1xf32>
    %254 = vector.broadcast %253 : f32 to vector<1x1xf32>
    %255 = arith.mulf %248, %14 : vector<4x1xf32>
    %256 = vector.shape_cast %255 : vector<4x1xf32> to vector<1x4x1xf32>
    %cst_125 = arith.constant dense<0.000000e+00> : vector<1xf32>
    %257 = vector.multi_reduction <add>, %256, %cst_125 [1, 2] : vector<1x4x1xf32> to vector<1xf32>
    %258 = vector.shape_cast %257 : vector<1xf32> to vector<1x1x1xf32>
    %259 = vector.extract %258[0, 0, 0] : f32 from vector<1x1x1xf32>
    %260 = vector.broadcast %259 : f32 to vector<1x1xf32>
    %cst_126 = arith.constant 0.001953125 : f32
    %261 = vector.broadcast %cst_126 : f32 to vector<1x1xf32>
    %262 = arith.mulf %254, %261 : vector<1x1xf32>
    %263 = vector.broadcast %262 : vector<1x1xf32> to vector<4x1xf32>
    %264 = arith.mulf %12, %263 : vector<4x1xf32>
    %cst_127 = arith.constant 0.001953125 : f32
    %265 = vector.broadcast %cst_127 : f32 to vector<1x1xf32>
    %266 = arith.mulf %260, %265 : vector<1x1xf32>
    %267 = vector.broadcast %266 : vector<1x1xf32> to vector<4x1xf32>
    %268 = arith.mulf %14, %267 : vector<4x1xf32>
    %269 = arith.addf %264, %268 : vector<4x1xf32>
    %270 = vector.broadcast %269 : vector<4x1xf32> to vector<4x256xf32>
    %271 = arith.subf %246, %270 : vector<4x256xf32>
    %272 = arith.mulf %271, %271 : vector<4x256xf32>
    %cst_128 = arith.constant dense<0.000000e+00> : vector<4xf32>
    %273 = vector.multi_reduction <add>, %272, %cst_128 [1] : vector<4x256xf32> to vector<4xf32>
    %274 = vector.shape_cast %273 : vector<4xf32> to vector<4x1xf32>
    %275 = arith.mulf %274, %12 : vector<4x1xf32>
    %276 = vector.shape_cast %275 : vector<4x1xf32> to vector<1x4x1xf32>
    %cst_129 = arith.constant dense<0.000000e+00> : vector<1xf32>
    %277 = vector.multi_reduction <add>, %276, %cst_129 [1, 2] : vector<1x4x1xf32> to vector<1xf32>
    %278 = vector.shape_cast %277 : vector<1xf32> to vector<1x1x1xf32>
    %279 = vector.extract %278[0, 0, 0] : f32 from vector<1x1x1xf32>
    %280 = vector.broadcast %279 : f32 to vector<1x1xf32>
    %cst_130 = arith.constant 0.001953125 : f32
    %281 = vector.broadcast %cst_130 : f32 to vector<1x1xf32>
    %282 = arith.mulf %280, %281 : vector<1x1xf32>
    %283 = arith.mulf %274, %14 : vector<4x1xf32>
    %284 = vector.shape_cast %283 : vector<4x1xf32> to vector<1x4x1xf32>
    %cst_131 = arith.constant dense<0.000000e+00> : vector<1xf32>
    %285 = vector.multi_reduction <add>, %284, %cst_131 [1, 2] : vector<1x4x1xf32> to vector<1xf32>
    %286 = vector.shape_cast %285 : vector<1xf32> to vector<1x1x1xf32>
    %287 = vector.extract %286[0, 0, 0] : f32 from vector<1x1x1xf32>
    %288 = vector.broadcast %287 : f32 to vector<1x1xf32>
    %cst_132 = arith.constant 0.001953125 : f32
    %289 = vector.broadcast %cst_132 : f32 to vector<1x1xf32>
    %290 = arith.mulf %288, %289 : vector<1x1xf32>
    %cst_133 = arith.constant 9.99999974E-6 : f32
    %291 = vector.broadcast %cst_133 : f32 to vector<1x1xf32>
    %292 = arith.addf %282, %291 : vector<1x1xf32>
    %293 = math.rsqrt %292 : vector<1x1xf32>
    %294 = vector.broadcast %293 : vector<1x1xf32> to vector<4x1xf32>
    %295 = arith.mulf %12, %294 : vector<4x1xf32>
    %cst_134 = arith.constant 9.99999974E-6 : f32
    %296 = vector.broadcast %cst_134 : f32 to vector<1x1xf32>
    %297 = arith.addf %290, %296 : vector<1x1xf32>
    %298 = math.rsqrt %297 : vector<1x1xf32>
    %299 = vector.broadcast %298 : vector<1x1xf32> to vector<4x1xf32>
    %300 = arith.mulf %14, %299 : vector<4x1xf32>
    %301 = arith.addf %295, %300 : vector<4x1xf32>
    %302 = arith.mulf %301, %26 : vector<4x1xf32>
    %303 = vector.broadcast %302 : vector<4x1xf32> to vector<4x256xf32>
    %304 = arith.mulf %271, %303 : vector<4x256xf32>
    %305 = vector.broadcast %28 : vector<4x1xf32> to vector<4x256xf32>
    %306 = arith.addf %304, %305 : vector<4x256xf32>
    %307 = arith.negf %306 : vector<4x256xf32>
    %308 = math.exp %307 : vector<4x256xf32>
    %cst_135 = arith.constant 1.000000e+00 : f32
    %309 = vector.broadcast %cst_135 : f32 to vector<4x256xf32>
    %310 = arith.addf %309, %308 : vector<4x256xf32>
    %311 = arith.divf %309, %310 : vector<4x256xf32>
    %312 = arith.mulf %306, %311 : vector<4x256xf32>
    %c0_136 = arith.constant 0 : index
    %c0_137 = arith.constant 0 : index
    %c0_138 = arith.constant 0 : index
    %313 = vector.load %arg6[%c0_136, %c0_137, %c0_138] : memref<1x4x256xf32, #tpu.memory_space<vmem>>, vector<1x4x256xf32>
    %314 = vector.shape_cast %313 : vector<1x4x256xf32> to vector<4x256xf32>
    %315 = vector.shape_cast %312 : vector<4x256xf32> to vector<1x4x256xf32>
    tpu.vector_store %arg6[%c0_136, %c0_137, %c0_138], %315 {strides = array<i32>} : memref<1x4x256xf32, #tpu.memory_space<vmem>>, vector<1x4x256xf32>,
    return
  }
  func.func @transform_0(%arg0: i32) -> (i32, i32, i32) {
    %c0_i32 = arith.constant 0 : i32
    %c0_i32_0 = arith.constant 0 : i32
    %c0_i32_1 = arith.constant 0 : i32
    return %arg0, %c0_i32, %c0_i32_0 : i32, i32, i32
  }
  func.func @transform_1(%arg0: i32) -> (i32, i32, i32) {
    %c0_i32 = arith.constant 0 : i32
    %c0_i32_0 = arith.constant 0 : i32
    %c0_i32_1 = arith.constant 0 : i32
    %c0_i32_2 = arith.constant 0 : i32
    return %c0_i32, %c0_i32_0, %c0_i32_1 : i32, i32, i32
  }
  func.func @transform_2(%arg0: i32) -> (i32, i32, i32) {
    %c0_i32 = arith.constant 0 : i32
    %c0_i32_0 = arith.constant 0 : i32
    %c0_i32_1 = arith.constant 0 : i32
    %c0_i32_2 = arith.constant 0 : i32
    return %c0_i32, %c0_i32_0, %c0_i32_1 : i32, i32, i32
  }
  func.func @transform_3(%arg0: i32) -> (i32, i32, i32) {
    %c0_i32 = arith.constant 0 : i32
    %c0_i32_0 = arith.constant 0 : i32
    %c0_i32_1 = arith.constant 0 : i32
    %c0_i32_2 = arith.constant 0 : i32
    return %c0_i32, %c0_i32_0, %c0_i32_1 : i32, i32, i32
  }
  func.func @transform_4(%arg0: i32) -> (i32, i32, i32) {
    %c0_i32 = arith.constant 0 : i32
    %c0_i32_0 = arith.constant 0 : i32
    %c0_i32_1 = arith.constant 0 : i32
    %c0_i32_2 = arith.constant 0 : i32
    return %c0_i32, %c0_i32_0, %c0_i32_1 : i32, i32, i32
  }
  func.func @transform_5(%arg0: i32) -> (i32, i32, i32) {
    %c0_i32 = arith.constant 0 : i32
    %c0_i32_0 = arith.constant 0 : i32
    %c0_i32_1 = arith.constant 0 : i32
    return %arg0, %c0_i32, %c0_i32_0 : i32, i32, i32
  }
}

</mosaic_0001>

<llo_original>
// kernel: tpu_custom_call.1
$region0: #{tpu_custom_call.1}
  #allocation0 [shape = 'u32[]', space=smem, size = 0x4, offset = 0x4, fixed_abs, tag = 'smem constant byte address 0x4 - core index']
  #allocation1 [shape = 'u32[72,128]{1,0:T(1,128)}', space=vmem, size = 0x9000, scoped, tag = 'internal scratch']
  %s0 = inlined_call_operand.vmem [shape: f32[2,4,256], index: 0, kind: input, shape index: {}]
  %s1 = inlined_call_operand.vmem [shape: bf16[9,4,4], index: 1, kind: input, shape index: {}]
  %s2 = inlined_call_operand.vmem [shape: bf16[9,4,4], index: 2, kind: input, shape index: {}]
  %s3 = inlined_call_operand.vmem [shape: f32[6,4,1], index: 3, kind: input, shape index: {}]
  %s4 = inlined_call_operand.vmem [shape: f32[4,1,256], index: 4, kind: input, shape index: {}]
  %s5 = inlined_call_operand.hbm [shape: f32[2,4,256], index: 5, kind: output, shape index: {}]
  %s6 = sld [smem:[#allocation0]]
  $region53: #{tpu_custom_call.1} parent=0
    _
  %s8 = ssub.s32 1, %s6
  %s9 = scalar_select 0, %s8, %s6
  $region1: #{tpu_custom_call.1} parent=0
    #allocation2 [shape = 'u8[8192]{0}', space=vmem, size = 0x2000, scoped, tag = 'output window, operand 0']
    #allocation3 [shape = 's32[2]{0}', space=sflag, size = 0x8, scoped, tag = 'scoped memory for tpu_custom_call.1']
    %10 = vsyncpa [#allocation3], 0
    %s11 = scalar_lea.sflag [#allocation3], 1
    %12 = vsyncpa %s11, 0
    loop: start=0, step=1, limit=4
    $region2: #{tpu_custom_call.1} parent=1 // loop_pre_header
      _
    $region3: #{tpu_custom_call.1} parent=1 // loop_header
      %s14 = sphi 0, %s18
      %p15 = scmp.ge.s32.totalorder %s14, 4
      %s24 = sphi 0, %s26
      %s27 = sphi 0, %s24
      %s28 = sphi 0, %s27
      %s44 = sphi 0, %s28
      %s48 = sphi 0, %s48
      %s50 = sphi 0, %s48
      %s51 = sphi 0, %s50
      %s65 = sphi 0, %s51
      %s69 = sphi 0, %s69
      %s71 = sphi 0, %s69
      %s72 = sphi 0, %s71
      %s86 = sphi 0, %s72
      %s90 = sphi 0, %s90
      %s92 = sphi 0, %s90
      %s93 = sphi 0, %s92
      %s107 = sphi 0, %s93
      %s111 = sphi 0, %s111
      %s113 = sphi 0, %s111
      %s114 = sphi 0, %s113
      %s128 = sphi 0, %s114
      %s134 = sphi 0, %s136
      %s137 = sphi 0, %s134
      %s138 = sphi 0, %s137
      %s154 = sphi 0, %s138
    $region4: #{tpu_custom_call.1} parent=1 // loop_header_branch
      %17 = sbr.rel (%p15) target = $region8
    $region5: #{tpu_custom_call.1} parent=1 // loop_body
      %s19 = ssub.s32 %s14, 1
      %s20 = ssub.s32 %s14, 2
      %s21 = sadd.s32 %s14, 1
      %s22 = ssub.s32 %s14, %s21
      %p23 = scmp.eq.s32.totalorder %s22, 0
      %s25 = sadd.s32 %s24, 1
      %s26 = scalar_select %p23, %s24, %s25
      %p29 = pneg %p23
      %p30 = scmp.eq.s32.totalorder %s14, 1
      %p31 = por %p29, %p30
      %p32 = scmp.ne.s32.totalorder %s24, %s27
      %p33 = scmp.eq.s32.totalorder %s14, 0
      %p34 = por %p32, %p33
      %p35 = scmp.ne.s32.totalorder %s24, %s27
      %p36 = scmp.eq.s32.totalorder %s19, 1
      %p37 = por %p35, %p36
      %p38 = scmp.ne.s32.totalorder %s27, %s28
      %p39 = scmp.eq.s32.totalorder %s19, 0
      %p40 = por %p38, %p39
      %p41 = scmp.ne.s32.totalorder %s27, %s28
      %p42 = scmp.eq.s32.totalorder %s20, 1
      %p43 = por %p41, %p42
      %p45 = scmp.ne.s32.totalorder %s28, %s44
      %p46 = scmp.eq.s32.totalorder %s20, 0
      %p47 = por %p45, %p46
      %s49 = sadd.s32 %s48, 1
      %p52 = scmp.eq.s32.totalorder %s14, 1
      %p53 = scmp.ne.s32.totalorder %s48, %s50
      %p54 = scmp.eq.s32.totalorder %s14, 0
      %p55 = por %p53, %p54
      %p56 = scmp.ne.s32.totalorder %s48, %s50
      %p57 = scmp.eq.s32.totalorder %s19, 1
      %p58 = por %p56, %p57
      %p59 = scmp.ne.s32.totalorder %s50, %s51
      %p60 = scmp.eq.s32.totalorder %s19, 0
      %p61 = por %p59, %p60
      %p62 = scmp.ne.s32.totalorder %s50, %s51
      %p63 = scmp.eq.s32.totalorder %s20, 1
      %p64 = por %p62, %p63
      %p66 = scmp.ne.s32.totalorder %s51, %s65
      %p67 = scmp.eq.s32.totalorder %s20, 0
      %p68 = por %p66, %p67
      %s70 = sadd.s32 %s69, 1
      %p73 = scmp.eq.s32.totalorder %s14, 1
      %p74 = scmp.ne.s32.totalorder %s69, %s71
      %p75 = scmp.eq.s32.totalorder %s14, 0
      %p76 = por %p74, %p75
      %p77 = scmp.ne.s32.totalorder %s69, %s71
      %p78 = scmp.eq.s32.totalorder %s19, 1
      %p79 = por %p77, %p78
      %p80 = scmp.ne.s32.totalorder %s71, %s72
      %p81 = scmp.eq.s32.totalorder %s19, 0
      %p82 = por %p80, %p81
      %p83 = scmp.ne.s32.totalorder %s71, %s72
      %p84 = scmp.eq.s32.totalorder %s20, 1
      %p85 = por %p83, %p84
      %p87 = scmp.ne.s32.totalorder %s72, %s86
      %p88 = scmp.eq.s32.totalorder %s20, 0
      %p89 = por %p87, %p88
      %s91 = sadd.s32 %s90, 1
      %p94 = scmp.eq.s32.totalorder %s14, 1
      %p95 = scmp.ne.s32.totalorder %s90, %s92
      %p96 = scmp.eq.s32.totalorder %s14, 0
      %p97 = por %p95, %p96
      %p98 = scmp.ne.s32.totalorder %s90, %s92
      %p99 = scmp.eq.s32.totalorder %s19, 1
      %p100 = por %p98, %p99
      %p101 = scmp.ne.s32.totalorder %s92, %s93
      %p102 = scmp.eq.s32.totalorder %s19, 0
      %p103 = por %p101, %p102
      %p104 = scmp.ne.s32.totalorder %s92, %s93
      %p105 = scmp.eq.s32.totalorder %s20, 1
      %p106 = por %p104, %p105
      %p108 = scmp.ne.s32.totalorder %s93, %s107
      %p109 = scmp.eq.s32.totalorder %s20, 0
      %p110 = por %p108, %p109
      %s112 = sadd.s32 %s111, 1
      %p115 = scmp.eq.s32.totalorder %s14, 1
      %p116 = scmp.ne.s32.totalorder %s111, %s113
      %p117 = scmp.eq.s32.totalorder %s14, 0
      %p118 = por %p116, %p117
      %p119 = scmp.ne.s32.totalorder %s111, %s113
      %p120 = scmp.eq.s32.totalorder %s19, 1
      %p121 = por %p119, %p120
      %p122 = scmp.ne.s32.totalorder %s113, %s114
      %p123 = scmp.eq.s32.totalorder %s19, 0
      %p124 = por %p122, %p123
      %p125 = scmp.ne.s32.totalorder %s113, %s114
      %p126 = scmp.eq.s32.totalorder %s20, 1
      %p127 = por %p125, %p126
      %p129 = scmp.ne.s32.totalorder %s114, %s128
      %p130 = scmp.eq.s32.totalorder %s20, 0
      %p131 = por %p129, %p130
      %s132 = ssub.s32 %s14, %s21
      %p133 = scmp.eq.s32.totalorder %s132, 0
      %s135 = sadd.s32 %s134, 1
      %s136 = scalar_select %p133, %s134, %s135
      %p139 = pneg %p133
      %p140 = scmp.eq.s32.totalorder %s14, 1
      %p141 = por %p139, %p140
      %p142 = scmp.ne.s32.totalorder %s134, %s137
      %p143 = scmp.eq.s32.totalorder %s14, 0
      %p144 = por %p142, %p143
      %p145 = scmp.ne.s32.totalorder %s134, %s137
      %p146 = scmp.eq.s32.totalorder %s19, 1
      %p147 = por %p145, %p146
      %p148 = scmp.ne.s32.totalorder %s137, %s138
      %p149 = scmp.eq.s32.totalorder %s19, 0
      %p150 = por %p148, %p149
      %p151 = scmp.ne.s32.totalorder %s137, %s138
      %p152 = scmp.eq.s32.totalorder %s20, 1
      %p153 = por %p151, %p152
      %p155 = scmp.ne.s32.totalorder %s138, %s154
      %p156 = scmp.eq.s32.totalorder %s20, 0
      %p157 = por %p155, %p156
      %p158 = scmp.le.s32.totalorder 1, %s14
      %p159 = scmp.lt.s32.totalorder %s14, 3
      %p160 = pnand %p158, %p159
      %p161 = pneg %p160
      // Predicated region
      $region9: #{tpu_custom_call.1} parent=5 // pred_check
        _
      $region10: #{tpu_custom_call.1} parent=5 // pred_check_branch
        %163 = sbr.rel (%p160) target = $region12
      $region11: #{tpu_custom_call.1} parent=5 // pred_region
        %s164 = ssub.s32 %s14, 1
        // Predicated region
        $region13: #{tpu_custom_call.1} parent=11 // pred_check
          %p165 = pneg %p61
        $region14: #{tpu_custom_call.1} parent=11 // pred_check_branch
          %167 = sbr.rel (%p165) target = $region16
        $region15: #{tpu_custom_call.1} parent=11 // pred_region
          _
        $region16: #{tpu_custom_call.1} parent=11 // pred_fallthru
          _
        // Predicated region
        $region17: #{tpu_custom_call.1} parent=11 // pred_check
          %p168 = pneg %p82
        $region18: #{tpu_custom_call.1} parent=11 // pred_check_branch
          %170 = sbr.rel (%p168) target = $region20
        $region19: #{tpu_custom_call.1} parent=11 // pred_region
          _
        $region20: #{tpu_custom_call.1} parent=11 // pred_fallthru
          _
        // Predicated region
        $region21: #{tpu_custom_call.1} parent=11 // pred_check
          %p171 = pneg %p103
        $region22: #{tpu_custom_call.1} parent=11 // pred_check_branch
          %173 = sbr.rel (%p171) target = $region24
        $region23: #{tpu_custom_call.1} parent=11 // pred_region
          _
        $region24: #{tpu_custom_call.1} parent=11 // pred_fallthru
          _
        // Predicated region
        $region25: #{tpu_custom_call.1} parent=11 // pred_check
          %p174 = pneg %p124
        $region26: #{tpu_custom_call.1} parent=11 // pred_check_branch
          %176 = sbr.rel (%p174) target = $region28
        $region27: #{tpu_custom_call.1} parent=11 // pred_region
          _
        $region28: #{tpu_custom_call.1} parent=11 // pred_fallthru
          _
      $region12: #{tpu_custom_call.1} parent=5 // pred_fallthru
        _
      %p177 = scmp.lt.s32.totalorder %s14, 2
      // Predicated region
      $region29: #{tpu_custom_call.1} parent=5 // pred_check
        %p178 = pneg %p177
      $region30: #{tpu_custom_call.1} parent=5 // pred_check_branch
        %180 = sbr.rel (%p178) target = $region32
      $region31: #{tpu_custom_call.1} parent=5 // pred_region
        // Predicated region
        $region33: #{tpu_custom_call.1} parent=31 // pred_check
          %p181 = pneg %p34
        $region34: #{tpu_custom_call.1} parent=31 // pred_check_branch
          %183 = sbr.rel (%p181) target = $region36
        $region35: #{tpu_custom_call.1} parent=31 // pred_region
          %p184 = scmp.lt.s32.totalorder %s14, 1
          %s185 = scalar_select %p184, %s14, 1
          %s186 = smul.addr %s185, 2
          %s187 = smul.addr %s186, 4
          %s188 = scalar_lea.vmem %s0, %s187
        $region36: #{tpu_custom_call.1} parent=31 // pred_fallthru
          _
      $region32: #{tpu_custom_call.1} parent=5 // pred_fallthru
        _
      %p189 = scmp.le.s32.totalorder 1, %s14
      %p190 = scmp.lt.s32.totalorder %s14, 3
      %p191 = pnand %p189, %p190
      %p192 = pneg %p191
      // Predicated region
      $region37: #{tpu_custom_call.1} parent=5 // pred_check
        _
      $region38: #{tpu_custom_call.1} parent=5 // pred_check_branch
        %194 = sbr.rel (%p191) target = $region40
      $region39: #{tpu_custom_call.1} parent=5 // pred_region
        %s195 = ssub.s32 %s14, 1
        %p196 = scmp.lt.s32.totalorder %s19, 1
        %s197 = scalar_select %p196, %s19, 1
        %s198 = smul.addr %s197, 2
        %s199 = smul.addr %s198, 4
        %s200 = scalar_lea.vmem %s0, %s199
        %p201 = pneg %p40
        %p202 = pneg %p37
        %p203 = pneg %p61
        %p204 = pneg %p58
        %p205 = pneg %p82
        %p206 = pneg %p79
        %p207 = pneg %p103
        %p208 = pneg %p100
        %p209 = pneg %p124
        %p210 = pneg %p121
        %p211 = pneg %p150
        %p212 = pneg %p147
        %s213 = sand.u32 %s137, 1
        %s214 = scalar_lea.sflag [#allocation3], %s213
        %s215 = sand.u32 %s137, 1
        %s216 = smul.addr %s215, 8
        %s217 = scalar_lea.vmem [#allocation2], %s216
        %p218 = scmp.lt.s32.totalorder %s19, 1
        %s219 = scalar_select %p218, %s19, 1
        %s220 = smul.addr %s219, 2
        %s221 = smul.addr %s220, 4
        %s222 = scalar_lea.vmem %s0, %s221
        %v224 = vld [vmem:[%s4] sm:$0x3]
        %s225 = scalar_lea.vmem %s4, 2
        %v226 = vld [vmem:[%s225] sm:$0x3]
        %s227 = scalar_lea.vmem %s4, 4
        %v228 = vld [vmem:[%s227] sm:$0x3]
        %s229 = scalar_lea.vmem %s4, 6
        %v230 = vld [vmem:[%s229] sm:$0x3]
        %v231 = vlaneseq
        %v232 = vshrl.u32 %v231, 7
        %vm233 = vcmp.lt.s32.totalorder %v232, 2
        %v234 = vsel %vm233, 1, 0
        %v235 = vcvt.s32.f32 %v234
        %v236 = vsub.f32 1.0, %v235
        %v237 = vld [vmem:[%s222] sm:$0xff]
        %v238 = vld [vmem:[%s3] sm:$0xf]
        %s239 = scalar_lea.vmem %s3, 4
        %v240 = vld [vmem:[%s239] sm:$0xf]
        %s241 = scalar_lea.vmem %s3, 8
        %v242 = vld [vmem:[%s241] sm:$0xf]
        %s243 = scalar_lea.vmem %s3, 12
        %v244 = vld [vmem:[%s243] sm:$0xf]
        %s245 = scalar_lea.vmem %s3, 16
        %v246 = vld [vmem:[%s245] sm:$0xf]
        %s247 = scalar_lea.vmem %s3, 20
        %v248 = vld [vmem:[%s247] sm:$0xf]
        %250 = vst [vmem:[#allocation1] ss:$2 sm:$0xff] %v237
        %v251 = vld.sshfl [vmem:[#allocation1] sm:$0xff pattern:$0x75316420]
        %v252 = vld.sshfl [vmem:[#allocation1 + $0x8] sm:$0xff pattern:$0x75316420]
        %255 = vrot.lane.b32.xlu0 %v251, 1
        %v256 = vpop.permute.xlu0 %255
        %257 = vrot.lane.b32.xlu0 %v252, 1
        %v258 = vpop.permute.xlu0 %257
        %v259 = vlaneseq
        %v260 = vand.u32 %v259, 127
        %vm261 = vcmp.lt.s32.totalorder %v260, 1
        %v262 = vsel %vm261, %v256, %v258
        %v263 = vsel %vm261, %v258, %v256
        %264 = vst [vmem:[#allocation1] ss:$2 sm:$0xff] %v237
        %v265 = vld.sshfl [vmem:[#allocation1] sm:$0xff pattern:$0x75316420]
        %v266 = vld.sshfl [vmem:[#allocation1 + $0x8] sm:$0xff pattern:$0x75316420]
        %269 = vrot.lane.b32.xlu0 %v265, 127
        %v270 = vpop.permute.xlu0 %269
        %271 = vrot.lane.b32.xlu0 %v266, 127
        %v272 = vpop.permute.xlu0 %271
        %vm273 = vcmp.lt.s32.totalorder %v260, 127
        %v274 = vsel %vm273, %v270, %v272
        %v275 = vsel %vm273, %v272, %v270
        %276 = vrot.lane.b32.xlu0 %v263, 16
        %v277 = vpop.permute.xlu0 %276
        %278 = vrot.lane.b32.xlu0 %v262, 16
        %v279 = vpop.permute.xlu0 %278
        %vm280 = vcmp.lt.s32.totalorder %v260, 16
        %v281 = vsel %vm280, %v277, %v279
        %v282 = vsel %vm280, %v279, %v277
        %v283 = vmul.f32 %v224, %v228
        %v285 = vperm.slane %v283, 0
        %v286 = vperm.slane %v283, 1
        %v289 = vmul.f32 %v282, %v285
        %v290 = vmul.f32 %v281, %v286
        %v291 = vld [vmem:[%s1] sm:$0x3]
        %v292 = vpack.c.bf16 %v289, %v289
        %v293 = vpack.c.bf16 %v290, %v290
        %294 = vst [vmem:[#allocation1] ss:$2 sm:$0xff] %v237
        %v295 = vld.sshfl [vmem:[#allocation1] sm:$0xff pattern:$0x75316420]
        %v296 = vld.sshfl [vmem:[#allocation1 + $0x8] sm:$0xff pattern:$0x75316420]
        %299 = vrot.lane.b32.xlu0 %v295, 16
        %v300 = vpop.permute.xlu0 %299
        %301 = vrot.lane.b32.xlu0 %v296, 16
        %v302 = vpop.permute.xlu0 %301
        %v303 = vsel %vm280, %v300, %v302
        %v304 = vsel %vm280, %v302, %v300
        %v306 = vperm.slane %v224, 0
        %v307 = vperm.slane %v224, 1
        %v310 = vmul.f32 %v304, %v306
        %v311 = vmul.f32 %v303, %v307
        %s312 = scalar_lea.vmem %s1, 2
        %v313 = vld [vmem:[%s312] sm:$0x3]
        %v314 = vpack.c.bf16 %v310, %v310
        %v315 = vpack.c.bf16 %v311, %v311
        %vm316 = vcmask 31744
        %v318 = vsel %vm316, %v313, 0
        %vm320 = vcmask 1041408
        %v322 = vsel %vm320, %v314, 0
        %v325 = vsel %vm320, %v315, 0
        %327 = vmatpush.bf16.msra.mxu0 0
        %328 = vmatpush.bf16.msra.mxu0 0
        %329 = vmatpush.bf16.msra.mxu0 0
        %330 = vmatpush.bf16.msra.mxu0 0
        %331 = vmatpush.bf16.msra.mxu0 0
        %332 = vmatpush.bf16.msra.mxu0 0
        %333 = vmatpush.bf16.msra.mxu0 0
        %334 = vmatpush.bf16.msra.mxu0 %v322
        %335 = vmatmul.bf16.gmra.mxu0 %v318
        %v336 = vpop.f32.mrf.mxu0
        %v337 = vadd.f32 0.0, %v336
        %v338 = vpop.f32.mrf.mxu0
        %339 = vdwg.mxu0
        %340 = vmatpush.bf16.msra.mxu0 0
        %341 = vmatpush.bf16.msra.mxu0 0
        %342 = vmatpush.bf16.msra.mxu0 0
        %343 = vmatpush.bf16.msra.mxu0 0
        %344 = vmatpush.bf16.msra.mxu0 0
        %345 = vmatpush.bf16.msra.mxu0 0
        %346 = vmatpush.bf16.msra.mxu0 0
        %347 = vmatpush.bf16.msra.mxu0 %v325
        %348 = vmatmul.bf16.gmra.mxu0 %v318
        %v349 = vpop.f32.mrf.mxu0
        %v350 = vadd.f32 0.0, %v349
        %v351 = vpop.f32.mrf.mxu0
        %352 = vdwg.mxu0
        %v354 = vsel %vm316, %v291, 0
        %v357 = vsel %vm320, %v292, 0
        %v360 = vsel %vm320, %v293, 0
        %362 = vmatpush.bf16.msra.mxu0 0
        %363 = vmatpush.bf16.msra.mxu0 0
        %364 = vmatpush.bf16.msra.mxu0 0
        %365 = vmatpush.bf16.msra.mxu0 0
        %366 = vmatpush.bf16.msra.mxu0 0
        %367 = vmatpush.bf16.msra.mxu0 0
        %368 = vmatpush.bf16.msra.mxu0 0
        %369 = vmatpush.bf16.msra.mxu0 %v357
        %370 = vmatmul.bf16.gmra.mxu0 %v354
        %v371 = vpop.f32.mrf.mxu0
        %v372 = vadd.f32 %v337, %v371
        %v373 = vpop.f32.mrf.mxu0
        %374 = vdwg.mxu0
        %375 = vmatpush.bf16.msra.mxu0 0
        %376 = vmatpush.bf16.msra.mxu0 0
        %377 = vmatpush.bf16.msra.mxu0 0
        %378 = vmatpush.bf16.msra.mxu0 0
        %379 = vmatpush.bf16.msra.mxu0 0
        %380 = vmatpush.bf16.msra.mxu0 0
        %381 = vmatpush.bf16.msra.mxu0 0
        %382 = vmatpush.bf16.msra.mxu0 %v360
        %383 = vmatmul.bf16.gmra.mxu0 %v354
        %v384 = vpop.f32.mrf.mxu0
        %v385 = vadd.f32 %v350, %v384
        %v386 = vpop.f32.mrf.mxu0
        %387 = vdwg.mxu0
        %388 = vrot.lane.b32.xlu0 %v274, 16
        %v389 = vpop.permute.xlu0 %388
        %390 = vrot.lane.b32.xlu0 %v275, 16
        %v391 = vpop.permute.xlu0 %390
        %v392 = vsel %vm280, %v389, %v391
        %v393 = vsel %vm280, %v391, %v389
        %v394 = vmul.f32 %v224, %v230
        %v396 = vperm.slane %v394, 0
        %v397 = vperm.slane %v394, 1
        %v400 = vmul.f32 %v393, %v396
        %v401 = vmul.f32 %v392, %v397
        %s402 = scalar_lea.vmem %s1, 4
        %v403 = vld [vmem:[%s402] sm:$0x3]
        %v404 = vpack.c.bf16 %v400, %v400
        %v405 = vpack.c.bf16 %v401, %v401
        %v407 = vsel %vm316, %v403, 0
        %v410 = vsel %vm320, %v404, 0
        %v413 = vsel %vm320, %v405, 0
        %415 = vmatpush.bf16.msra.mxu0 0
        %416 = vmatpush.bf16.msra.mxu0 0
        %417 = vmatpush.bf16.msra.mxu0 0
        %418 = vmatpush.bf16.msra.mxu0 0
        %419 = vmatpush.bf16.msra.mxu0 0
        %420 = vmatpush.bf16.msra.mxu0 0
        %421 = vmatpush.bf16.msra.mxu0 0
        %422 = vmatpush.bf16.msra.mxu0 %v410
        %423 = vmatmul.bf16.gmra.mxu0 %v407
        %v424 = vpop.f32.mrf.mxu0
        %v425 = vadd.f32 0.0, %v424
        %v426 = vpop.f32.mrf.mxu0
        %427 = vdwg.mxu0
        %428 = vmatpush.bf16.msra.mxu0 0
        %429 = vmatpush.bf16.msra.mxu0 0
        %430 = vmatpush.bf16.msra.mxu0 0
        %431 = vmatpush.bf16.msra.mxu0 0
        %432 = vmatpush.bf16.msra.mxu0 0
        %433 = vmatpush.bf16.msra.mxu0 0
        %434 = vmatpush.bf16.msra.mxu0 0
        %435 = vmatpush.bf16.msra.mxu0 %v413
        %436 = vmatmul.bf16.gmra.mxu0 %v407
        %v437 = vpop.f32.mrf.mxu0
        %v438 = vadd.f32 0.0, %v437
        %v439 = vpop.f32.mrf.mxu0
        %440 = vdwg.mxu0
        %v441 = vadd.f32 %v372, %v425
        %v442 = vadd.f32 %v385, %v438
        %v444 = vperm.slane %v228, 0
        %v445 = vperm.slane %v228, 1
        %v448 = vmul.f32 %v263, %v444
        %v449 = vmul.f32 %v262, %v445
        %s450 = scalar_lea.vmem %s1, 6
        %v451 = vld [vmem:[%s450] sm:$0x3]
        %v452 = vpack.c.bf16 %v448, %v448
        %v453 = vpack.c.bf16 %v449, %v449
        %v455 = vsel %vm316, %v451, 0
        %v458 = vsel %vm320, %v452, 0
        %v461 = vsel %vm320, %v453, 0
        %463 = vmatpush.bf16.msra.mxu0 0
        %464 = vmatpush.bf16.msra.mxu0 0
        %465 = vmatpush.bf16.msra.mxu0 0
        %466 = vmatpush.bf16.msra.mxu0 0
        %467 = vmatpush.bf16.msra.mxu0 0
        %468 = vmatpush.bf16.msra.mxu0 0
        %469 = vmatpush.bf16.msra.mxu0 0
        %470 = vmatpush.bf16.msra.mxu0 %v458
        %471 = vmatmul.bf16.gmra.mxu0 %v455
        %v472 = vpop.f32.mrf.mxu0
        %v473 = vadd.f32 0.0, %v472
        %v474 = vpop.f32.mrf.mxu0
        %475 = vdwg.mxu0
        %476 = vmatpush.bf16.msra.mxu0 0
        %477 = vmatpush.bf16.msra.mxu0 0
        %478 = vmatpush.bf16.msra.mxu0 0
        %479 = vmatpush.bf16.msra.mxu0 0
        %480 = vmatpush.bf16.msra.mxu0 0
        %481 = vmatpush.bf16.msra.mxu0 0
        %482 = vmatpush.bf16.msra.mxu0 0
        %483 = vmatpush.bf16.msra.mxu0 %v461
        %484 = vmatmul.bf16.gmra.mxu0 %v455
        %v485 = vpop.f32.mrf.mxu0
        %v486 = vadd.f32 0.0, %v485
        %v487 = vpop.f32.mrf.mxu0
        %488 = vdwg.mxu0
        %v489 = vadd.f32 %v441, %v473
        %v490 = vadd.f32 %v442, %v486
        %s491 = scalar_lea.vmem %s1, 8
        %v492 = vld [vmem:[%s491] sm:$0x3]
        %493 = vst [vmem:[#allocation1] ss:$2 sm:$0xff] %v237
        %v494 = vld.sshfl [vmem:[#allocation1] sm:$0xff pattern:$0x75316420]
        %v495 = vld.sshfl [vmem:[#allocation1 + $0x8] sm:$0xff pattern:$0x75316420]
        %v498 = vpack.c.bf16 %v494, %v494
        %v499 = vpack.c.bf16 %v495, %v495
        %v501 = vsel %vm316, %v492, 0
        %v504 = vsel %vm320, %v498, 0
        %v507 = vsel %vm320, %v499, 0
        %509 = vmatpush.bf16.msra.mxu0 0
        %510 = vmatpush.bf16.msra.mxu0 0
        %511 = vmatpush.bf16.msra.mxu0 0
        %512 = vmatpush.bf16.msra.mxu0 0
        %513 = vmatpush.bf16.msra.mxu0 0
        %514 = vmatpush.bf16.msra.mxu0 0
        %515 = vmatpush.bf16.msra.mxu0 0
        %516 = vmatpush.bf16.msra.mxu0 %v504
        %517 = vmatmul.bf16.gmra.mxu0 %v501
        %v518 = vpop.f32.mrf.mxu0
        %v519 = vadd.f32 0.0, %v518
        %v520 = vpop.f32.mrf.mxu0
        %521 = vdwg.mxu0
        %522 = vmatpush.bf16.msra.mxu0 0
        %523 = vmatpush.bf16.msra.mxu0 0
        %524 = vmatpush.bf16.msra.mxu0 0
        %525 = vmatpush.bf16.msra.mxu0 0
        %526 = vmatpush.bf16.msra.mxu0 0
        %527 = vmatpush.bf16.msra.mxu0 0
        %528 = vmatpush.bf16.msra.mxu0 0
        %529 = vmatpush.bf16.msra.mxu0 %v507
        %530 = vmatmul.bf16.gmra.mxu0 %v501
        %v531 = vpop.f32.mrf.mxu0
        %v532 = vadd.f32 0.0, %v531
        %v533 = vpop.f32.mrf.mxu0
        %534 = vdwg.mxu0
        %v535 = vadd.f32 %v489, %v519
        %v536 = vadd.f32 %v490, %v532
        %v538 = vperm.slane %v230, 0
        %v539 = vperm.slane %v230, 1
        %v542 = vmul.f32 %v274, %v538
        %v543 = vmul.f32 %v275, %v539
        %s544 = scalar_lea.vmem %s1, 10
        %v545 = vld [vmem:[%s544] sm:$0x3]
        %v546 = vpack.c.bf16 %v542, %v542
        %v547 = vpack.c.bf16 %v543, %v543
        %v549 = vsel %vm316, %v545, 0
        %v552 = vsel %vm320, %v546, 0
        %v555 = vsel %vm320, %v547, 0
        %557 = vmatpush.bf16.msra.mxu0 0
        %558 = vmatpush.bf16.msra.mxu0 0
        %559 = vmatpush.bf16.msra.mxu0 0
        %560 = vmatpush.bf16.msra.mxu0 0
        %561 = vmatpush.bf16.msra.mxu0 0
        %562 = vmatpush.bf16.msra.mxu0 0
        %563 = vmatpush.bf16.msra.mxu0 0
        %564 = vmatpush.bf16.msra.mxu0 %v552
        %565 = vmatmul.bf16.gmra.mxu0 %v549
        %v566 = vpop.f32.mrf.mxu0
        %v567 = vadd.f32 0.0, %v566
        %v568 = vpop.f32.mrf.mxu0
        %569 = vdwg.mxu0
        %570 = vmatpush.bf16.msra.mxu0 0
        %571 = vmatpush.bf16.msra.mxu0 0
        %572 = vmatpush.bf16.msra.mxu0 0
        %573 = vmatpush.bf16.msra.mxu0 0
        %574 = vmatpush.bf16.msra.mxu0 0
        %575 = vmatpush.bf16.msra.mxu0 0
        %576 = vmatpush.bf16.msra.mxu0 0
        %577 = vmatpush.bf16.msra.mxu0 %v555
        %578 = vmatmul.bf16.gmra.mxu0 %v549
        %v579 = vpop.f32.mrf.mxu0
        %v580 = vadd.f32 0.0, %v579
        %v581 = vpop.f32.mrf.mxu0
        %582 = vdwg.mxu0
        %v583 = vadd.f32 %v535, %v567
        %v584 = vadd.f32 %v536, %v580
        %585 = vrot.lane.b32.xlu0 %v263, 112
        %v586 = vpop.permute.xlu0 %585
        %587 = vrot.lane.b32.xlu0 %v262, 112
        %v588 = vpop.permute.xlu0 %587
        %vm589 = vcmp.lt.s32.totalorder %v260, 112
        %v590 = vsel %vm589, %v586, %v588
        %v591 = vsel %vm589, %v588, %v586
        %v592 = vmul.f32 %v226, %v228
        %v594 = vperm.slane %v592, 0
        %v595 = vperm.slane %v592, 1
        %v598 = vmul.f32 %v590, %v594
        %v599 = vmul.f32 %v591, %v595
        %s600 = scalar_lea.vmem %s1, 12
        %v601 = vld [vmem:[%s600] sm:$0x3]
        %v602 = vpack.c.bf16 %v598, %v598
        %v603 = vpack.c.bf16 %v599, %v599
        %v605 = vsel %vm316, %v601, 0
        %v608 = vsel %vm320, %v602, 0
        %v611 = vsel %vm320, %v603, 0
        %613 = vmatpush.bf16.msra.mxu0 0
        %614 = vmatpush.bf16.msra.mxu0 0
        %615 = vmatpush.bf16.msra.mxu0 0
        %616 = vmatpush.bf16.msra.mxu0 0
        %617 = vmatpush.bf16.msra.mxu0 0
        %618 = vmatpush.bf16.msra.mxu0 0
        %619 = vmatpush.bf16.msra.mxu0 0
        %620 = vmatpush.bf16.msra.mxu0 %v608
        %621 = vmatmul.bf16.gmra.mxu0 %v605
        %v622 = vpop.f32.mrf.mxu0
        %v623 = vadd.f32 0.0, %v622
        %v624 = vpop.f32.mrf.mxu0
        %625 = vdwg.mxu0
        %626 = vmatpush.bf16.msra.mxu0 0
        %627 = vmatpush.bf16.msra.mxu0 0
        %628 = vmatpush.bf16.msra.mxu0 0
        %629 = vmatpush.bf16.msra.mxu0 0
        %630 = vmatpush.bf16.msra.mxu0 0
        %631 = vmatpush.bf16.msra.mxu0 0
        %632 = vmatpush.bf16.msra.mxu0 0
        %633 = vmatpush.bf16.msra.mxu0 %v611
        %634 = vmatmul.bf16.gmra.mxu0 %v605
        %v635 = vpop.f32.mrf.mxu0
        %v636 = vadd.f32 0.0, %v635
        %v637 = vpop.f32.mrf.mxu0
        %638 = vdwg.mxu0
        %v639 = vadd.f32 %v583, %v623
        %v640 = vadd.f32 %v584, %v636
        %641 = vst [vmem:[#allocation1] ss:$2 sm:$0xff] %v237
        %v642 = vld.sshfl [vmem:[#allocation1] sm:$0xff pattern:$0x75316420]
        %v643 = vld.sshfl [vmem:[#allocation1 + $0x8] sm:$0xff pattern:$0x75316420]
        %646 = vrot.lane.b32.xlu0 %v642, 112
        %v647 = vpop.permute.xlu0 %646
        %648 = vrot.lane.b32.xlu0 %v643, 112
        %v649 = vpop.permute.xlu0 %648
        %v650 = vsel %vm589, %v647, %v649
        %v651 = vsel %vm589, %v649, %v647
        %v653 = vperm.slane %v226, 0
        %v654 = vperm.slane %v226, 1
        %v657 = vmul.f32 %v650, %v653
        %v658 = vmul.f32 %v651, %v654
        %s659 = scalar_lea.vmem %s1, 14
        %v660 = vld [vmem:[%s659] sm:$0x3]
        %v661 = vpack.c.bf16 %v657, %v657
        %v662 = vpack.c.bf16 %v658, %v658
        %v664 = vsel %vm316, %v660, 0
        %v667 = vsel %vm320, %v661, 0
        %v670 = vsel %vm320, %v662, 0
        %672 = vmatpush.bf16.msra.mxu0 0
        %673 = vmatpush.bf16.msra.mxu0 0
        %674 = vmatpush.bf16.msra.mxu0 0
        %675 = vmatpush.bf16.msra.mxu0 0
        %676 = vmatpush.bf16.msra.mxu0 0
        %677 = vmatpush.bf16.msra.mxu0 0
        %678 = vmatpush.bf16.msra.mxu0 0
        %679 = vmatpush.bf16.msra.mxu0 %v667
        %680 = vmatmul.bf16.gmra.mxu0 %v664
        %v681 = vpop.f32.mrf.mxu0
        %v682 = vadd.f32 0.0, %v681
        %v683 = vpop.f32.mrf.mxu0
        %684 = vdwg.mxu0
        %685 = vmatpush.bf16.msra.mxu0 0
        %686 = vmatpush.bf16.msra.mxu0 0
        %687 = vmatpush.bf16.msra.mxu0 0
        %688 = vmatpush.bf16.msra.mxu0 0
        %689 = vmatpush.bf16.msra.mxu0 0
        %690 = vmatpush.bf16.msra.mxu0 0
        %691 = vmatpush.bf16.msra.mxu0 0
        %692 = vmatpush.bf16.msra.mxu0 %v670
        %693 = vmatmul.bf16.gmra.mxu0 %v664
        %v694 = vpop.f32.mrf.mxu0
        %v695 = vadd.f32 0.0, %v694
        %v696 = vpop.f32.mrf.mxu0
        %697 = vdwg.mxu0
        %v698 = vadd.f32 %v639, %v682
        %v699 = vadd.f32 %v640, %v695
        %700 = vrot.lane.b32.xlu0 %v274, 112
        %v701 = vpop.permute.xlu0 %700
        %702 = vrot.lane.b32.xlu0 %v275, 112
        %v703 = vpop.permute.xlu0 %702
        %v704 = vsel %vm589, %v701, %v703
        %v705 = vsel %vm589, %v703, %v701
        %v706 = vmul.f32 %v226, %v230
        %v708 = vperm.slane %v706, 0
        %v709 = vperm.slane %v706, 1
        %v712 = vmul.f32 %v704, %v708
        %v713 = vmul.f32 %v705, %v709
        %s714 = scalar_lea.vmem %s1, 16
        %v715 = vld [vmem:[%s714] sm:$0x3]
        %v716 = vpack.c.bf16 %v712, %v712
        %v717 = vpack.c.bf16 %v713, %v713
        %v719 = vsel %vm316, %v715, 0
        %v722 = vsel %vm320, %v716, 0
        %v725 = vsel %vm320, %v717, 0
        %727 = vmatpush.bf16.msra.mxu0 0
        %728 = vmatpush.bf16.msra.mxu0 0
        %729 = vmatpush.bf16.msra.mxu0 0
        %730 = vmatpush.bf16.msra.mxu0 0
        %731 = vmatpush.bf16.msra.mxu0 0
        %732 = vmatpush.bf16.msra.mxu0 0
        %733 = vmatpush.bf16.msra.mxu0 0
        %734 = vmatpush.bf16.msra.mxu0 %v722
        %735 = vmatmul.bf16.gmra.mxu0 %v719
        %v736 = vpop.f32.mrf.mxu0
        %v737 = vadd.f32 0.0, %v736
        %v738 = vpop.f32.mrf.mxu0
        %739 = vdwg.mxu0
        %740 = vmatpush.bf16.msra.mxu0 0
        %741 = vmatpush.bf16.msra.mxu0 0
        %742 = vmatpush.bf16.msra.mxu0 0
        %743 = vmatpush.bf16.msra.mxu0 0
        %744 = vmatpush.bf16.msra.mxu0 0
        %745 = vmatpush.bf16.msra.mxu0 0
        %746 = vmatpush.bf16.msra.mxu0 0
        %747 = vmatpush.bf16.msra.mxu0 %v725
        %748 = vmatmul.bf16.gmra.mxu0 %v719
        %v749 = vpop.f32.mrf.mxu0
        %v750 = vadd.f32 0.0, %v749
        %v751 = vpop.f32.mrf.mxu0
        %752 = vdwg.mxu0
        %v753 = vadd.f32 %v698, %v737
        %v754 = vadd.f32 %v699, %v750
        %756 = vset.pattern.permute.xlu0 0
        %757 = vperm.xlu0 %756, %v238
        %v758 = vpop.permute.xlu0 %757
        %v760 = vadd.f32 %v753, %v758
        %v761 = vadd.f32 %v754, %v758
        %vm762 = vcmask 1043456
        %v763 = vsel %vm762, %v760, 0.0
        %v764 = vsel %vm762, %v761, 0.0
        %v765 = vadd.f32 %v763, %v764
        %766 = vadd.xlane.f32.xlu0 %v765
        %v767 = vpop.xlane.xlu0 %766
        %v768 = vmul.f32 %v767, %v235
        %vm769 = vcmask 3072
        %v770 = vsel %vm769, %v768, 0.0
        %771 = vadd.xlane.f32.xlu0 %v770
        %v772 = vpop.xlane.xlu0 %771
        %v773 = vrot.slane %v772, 4
        %v774 = vadd.f32 %v772, %v773
        %v775 = vrot.slane %v774, 2
        %v776 = vadd.f32 %v774, %v775
        %v777 = vrot.slane %v776, 1
        %v778 = vadd.f32 %v776, %v777
        %s779 = vtos %v778
        %v780 = vstv %s779
        %v781 = vmul.f32 %v767, %v236
        %v782 = vsel %vm769, %v781, 0.0
        %783 = vadd.xlane.f32.xlu0 %v782
        %v784 = vpop.xlane.xlu0 %783
        %v785 = vrot.slane %v784, 4
        %v786 = vadd.f32 %v784, %v785
        %v787 = vrot.slane %v786, 2
        %v788 = vadd.f32 %v786, %v787
        %v789 = vrot.slane %v788, 1
        %v790 = vadd.f32 %v788, %v789
        %s791 = vtos %v790
        %v792 = vstv %s791
        %v793 = vmul.f32 %v780, 0.001953125
        %v794 = vmul.f32 %v235, %v793
        %v795 = vmul.f32 %v792, 0.001953125
        %v796 = vmul.f32 %v236, %v795
        %v797 = vadd.f32 %v794, %v796
        %v798 = vsub.f32 %v760, %v797
        %v799 = vsub.f32 %v761, %v797
        %v800 = vmul.f32 %v798, %v798
        %v801 = vmul.f32 %v799, %v799
        %v802 = vsel %vm762, %v800, 0.0
        %v803 = vsel %vm762, %v801, 0.0
        %v804 = vadd.f32 %v802, %v803
        %805 = vadd.xlane.f32.xlu0 %v804
        %v806 = vpop.xlane.xlu0 %805
        %v807 = vmul.f32 %v806, %v235
        %v808 = vsel %vm769, %v807, 0.0
        %809 = vadd.xlane.f32.xlu0 %v808
        %v810 = vpop.xlane.xlu0 %809
        %v811 = vrot.slane %v810, 4
        %v812 = vadd.f32 %v810, %v811
        %v813 = vrot.slane %v812, 2
        %v814 = vadd.f32 %v812, %v813
        %v815 = vrot.slane %v814, 1
        %v816 = vadd.f32 %v814, %v815
        %s817 = vtos %v816
        %v818 = vstv %s817
        %v819 = vmul.f32 %v818, 0.001953125
        %v820 = vmul.f32 %v806, %v236
        %v821 = vsel %vm769, %v820, 0.0
        %822 = vadd.xlane.f32.xlu0 %v821
        %v823 = vpop.xlane.xlu0 %822
        %v824 = vrot.slane %v823, 4
        %v825 = vadd.f32 %v823, %v824
        %v826 = vrot.slane %v825, 2
        %v827 = vadd.f32 %v825, %v826
        %v828 = vrot.slane %v827, 1
        %v829 = vadd.f32 %v827, %v828
        %s830 = vtos %v829
        %v831 = vstv %s830
        %v832 = vmul.f32 %v831, 0.001953125
        %v833 = vadd.f32 %v819, 1e-05
        %v834 = vrsqrt.pop %v833
        %v835 = vmul.f32 %v834, %v833
        %v836 = vmul.f32 %v835, %v834
        %v837 = vmul.f32 0.5, %v836
        %v838 = vsub.f32 1.5, %v837
        %v839 = vmul.f32 %v834, %v838
        %vm840 = vweird.f32 %v833
        %vm841 = vweird.f32 %v834
        %vm842 = vmor %vm840, %vm841
        %v843 = vsel %vm842, %v834, %v839
        %v844 = vmul.f32 %v235, %v843
        %v845 = vadd.f32 %v832, 1e-05
        %v846 = vrsqrt.pop %v845
        %v847 = vmul.f32 %v846, %v845
        %v848 = vmul.f32 %v847, %v846
        %v849 = vmul.f32 0.5, %v848
        %v850 = vsub.f32 1.5, %v849
        %v851 = vmul.f32 %v846, %v850
        %vm852 = vweird.f32 %v845
        %vm853 = vweird.f32 %v846
        %vm854 = vmor %vm852, %vm853
        %v855 = vsel %vm854, %v846, %v851
        %v856 = vmul.f32 %v236, %v855
        %v857 = vadd.f32 %v844, %v856
        %v858 = vmul.f32 %v857, %v240
        %860 = vset.pattern.permute.xlu0 0
        %861 = vperm.xlu0 %860, %v858
        %v862 = vpop.permute.xlu0 %861
        %v864 = vmul.f32 %v798, %v862
        %v865 = vmul.f32 %v799, %v862
        %867 = vset.pattern.permute.xlu0 0
        %868 = vperm.xlu0 %867, %v242
        %v869 = vpop.permute.xlu0 %868
        %v871 = vadd.f32 %v864, %v869
        %v872 = vadd.f32 %v865, %v869
        %v873 = vxor.u32 %v871, 2147483648
        %v874 = vxor.u32 %v872, 2147483648
        %v875 = vmul.f32 %v873, 1.442695
        %v876 = vpow.pop %v875
        %v877 = vmul.f32 %v874, 1.442695
        %v878 = vpow.pop %v877
        %v879 = vadd.f32 %v876, 1.0
        %v880 = vadd.f32 %v878, 1.0
        %v881 = vrcp.pop %v879
        %v882 = vmul.f32 %v879, %v881
        %v883 = vsub.f32 1.0, %v882
        %v884 = vmul.f32 %v881, %v883
        %v885 = vadd.f32 %v881, %v884
        %vm886 = vweird.f32 %v879
        %vm887 = vweird.f32 %v881
        %vm888 = vmor %vm886, %vm887
        %v889 = vsel %vm888, %v881, %v885
        %v890 = vand.u32 2147483647, %v879
        %vm891 = vcmp.eq.f32.partialorder %v890, 8.507059e+37
        %v892 = vand.u32 %v879, 2147483648
        %v893 = vor.u32 1.1754944e-38, %v892
        %v894 = vsel %vm891, %v893, %v889
        %v895 = vmul.f32 1.0, %v894
        %v896 = vrcp.pop %v880
        %v897 = vmul.f32 %v880, %v896
        %v898 = vsub.f32 1.0, %v897
        %v899 = vmul.f32 %v896, %v898
        %v900 = vadd.f32 %v896, %v899
        %vm901 = vweird.f32 %v880
        %vm902 = vweird.f32 %v896
        %vm903 = vmor %vm901, %vm902
        %v904 = vsel %vm903, %v896, %v900
        %v905 = vand.u32 2147483647, %v880
        %vm906 = vcmp.eq.f32.partialorder %v905, 8.507059e+37
        %v907 = vand.u32 %v880, 2147483648
        %v908 = vor.u32 1.1754944e-38, %v907
        %v909 = vsel %vm906, %v908, %v904
        %v910 = vmul.f32 1.0, %v909
        %v911 = vmul.f32 %v871, %v895
        %v912 = vmul.f32 %v872, %v910
        %913 = vrot.lane.b32.xlu0 %v911, 1
        %v914 = vpop.permute.xlu0 %913
        %915 = vrot.lane.b32.xlu0 %v912, 1
        %v916 = vpop.permute.xlu0 %915
        %v917 = vsel %vm261, %v914, %v916
        %v918 = vsel %vm261, %v916, %v914
        %919 = vrot.lane.b32.xlu0 %v911, 127
        %v920 = vpop.permute.xlu0 %919
        %921 = vrot.lane.b32.xlu0 %v912, 127
        %v922 = vpop.permute.xlu0 %921
        %v923 = vsel %vm273, %v920, %v922
        %v924 = vsel %vm273, %v922, %v920
        %925 = vrot.lane.b32.xlu0 %v918, 16
        %v926 = vpop.permute.xlu0 %925
        %927 = vrot.lane.b32.xlu0 %v917, 16
        %v928 = vpop.permute.xlu0 %927
        %v929 = vsel %vm280, %v926, %v928
        %v930 = vsel %vm280, %v928, %v926
        %v931 = vmul.f32 %v930, %v285
        %v932 = vmul.f32 %v929, %v286
        %v933 = vld [vmem:[%s2] sm:$0x3]
        %v934 = vpack.c.bf16 %v931, %v931
        %v935 = vpack.c.bf16 %v932, %v932
        %936 = vrot.lane.b32.xlu0 %v911, 16
        %v937 = vpop.permute.xlu0 %936
        %938 = vrot.lane.b32.xlu0 %v912, 16
        %v939 = vpop.permute.xlu0 %938
        %v940 = vsel %vm280, %v937, %v939
        %v941 = vsel %vm280, %v939, %v937
        %v942 = vmul.f32 %v941, %v306
        %v943 = vmul.f32 %v940, %v307
        %s944 = scalar_lea.vmem %s2, 2
        %v945 = vld [vmem:[%s944] sm:$0x3]
        %v946 = vpack.c.bf16 %v942, %v942
        %v947 = vpack.c.bf16 %v943, %v943
        %v949 = vsel %vm316, %v945, 0
        %v952 = vsel %vm320, %v946, 0
        %v955 = vsel %vm320, %v947, 0
        %957 = vmatpush.bf16.msra.mxu0 0
        %958 = vmatpush.bf16.msra.mxu0 0
        %959 = vmatpush.bf16.msra.mxu0 0
        %960 = vmatpush.bf16.msra.mxu0 0
        %961 = vmatpush.bf16.msra.mxu0 0
        %962 = vmatpush.bf16.msra.mxu0 0
        %963 = vmatpush.bf16.msra.mxu0 0
        %964 = vmatpush.bf16.msra.mxu0 %v952
        %965 = vmatmul.bf16.gmra.mxu0 %v949
        %v966 = vpop.f32.mrf.mxu0
        %v967 = vadd.f32 0.0, %v966
        %v968 = vpop.f32.mrf.mxu0
        %969 = vdwg.mxu0
        %970 = vmatpush.bf16.msra.mxu0 0
        %971 = vmatpush.bf16.msra.mxu0 0
        %972 = vmatpush.bf16.msra.mxu0 0
        %973 = vmatpush.bf16.msra.mxu0 0
        %974 = vmatpush.bf16.msra.mxu0 0
        %975 = vmatpush.bf16.msra.mxu0 0
        %976 = vmatpush.bf16.msra.mxu0 0
        %977 = vmatpush.bf16.msra.mxu0 %v955
        %978 = vmatmul.bf16.gmra.mxu0 %v949
        %v979 = vpop.f32.mrf.mxu0
        %v980 = vadd.f32 0.0, %v979
        %v981 = vpop.f32.mrf.mxu0
        %982 = vdwg.mxu0
        %v984 = vsel %vm316, %v933, 0
        %v987 = vsel %vm320, %v934, 0
        %v990 = vsel %vm320, %v935, 0
        %992 = vmatpush.bf16.msra.mxu0 0
        %993 = vmatpush.bf16.msra.mxu0 0
        %994 = vmatpush.bf16.msra.mxu0 0
        %995 = vmatpush.bf16.msra.mxu0 0
        %996 = vmatpush.bf16.msra.mxu0 0
        %997 = vmatpush.bf16.msra.mxu0 0
        %998 = vmatpush.bf16.msra.mxu0 0
        %999 = vmatpush.bf16.msra.mxu0 %v987
        %1000 = vmatmul.bf16.gmra.mxu0 %v984
        %v1001 = vpop.f32.mrf.mxu0
        %v1002 = vadd.f32 %v967, %v1001
        %v1003 = vpop.f32.mrf.mxu0
        %1004 = vdwg.mxu0
        %1005 = vmatpush.bf16.msra.mxu0 0
        %1006 = vmatpush.bf16.msra.mxu0 0
        %1007 = vmatpush.bf16.msra.mxu0 0
        %1008 = vmatpush.bf16.msra.mxu0 0
        %1009 = vmatpush.bf16.msra.mxu0 0
        %1010 = vmatpush.bf16.msra.mxu0 0
        %1011 = vmatpush.bf16.msra.mxu0 0
        %1012 = vmatpush.bf16.msra.mxu0 %v990
        %1013 = vmatmul.bf16.gmra.mxu0 %v984
        %v1014 = vpop.f32.mrf.mxu0
        %v1015 = vadd.f32 %v980, %v1014
        %v1016 = vpop.f32.mrf.mxu0
        %1017 = vdwg.mxu0
        %1018 = vrot.lane.b32.xlu0 %v923, 16
        %v1019 = vpop.permute.xlu0 %1018
        %1020 = vrot.lane.b32.xlu0 %v924, 16
        %v1021 = vpop.permute.xlu0 %1020
        %v1022 = vsel %vm280, %v1019, %v1021
        %v1023 = vsel %vm280, %v1021, %v1019
        %v1024 = vmul.f32 %v1023, %v396
        %v1025 = vmul.f32 %v1022, %v397
        %s1026 = scalar_lea.vmem %s2, 4
        %v1027 = vld [vmem:[%s1026] sm:$0x3]
        %v1028 = vpack.c.bf16 %v1024, %v1024
        %v1029 = vpack.c.bf16 %v1025, %v1025
        %v1031 = vsel %vm316, %v1027, 0
        %v1034 = vsel %vm320, %v1028, 0
        %v1037 = vsel %vm320, %v1029, 0
        %1039 = vmatpush.bf16.msra.mxu0 0
        %1040 = vmatpush.bf16.msra.mxu0 0
        %1041 = vmatpush.bf16.msra.mxu0 0
        %1042 = vmatpush.bf16.msra.mxu0 0
        %1043 = vmatpush.bf16.msra.mxu0 0
        %1044 = vmatpush.bf16.msra.mxu0 0
        %1045 = vmatpush.bf16.msra.mxu0 0
        %1046 = vmatpush.bf16.msra.mxu0 %v1034
        %1047 = vmatmul.bf16.gmra.mxu0 %v1031
        %v1048 = vpop.f32.mrf.mxu0
        %v1049 = vadd.f32 0.0, %v1048
        %v1050 = vpop.f32.mrf.mxu0
        %1051 = vdwg.mxu0
        %1052 = vmatpush.bf16.msra.mxu0 0
        %1053 = vmatpush.bf16.msra.mxu0 0
        %1054 = vmatpush.bf16.msra.mxu0 0
        %1055 = vmatpush.bf16.msra.mxu0 0
        %1056 = vmatpush.bf16.msra.mxu0 0
        %1057 = vmatpush.bf16.msra.mxu0 0
        %1058 = vmatpush.bf16.msra.mxu0 0
        %1059 = vmatpush.bf16.msra.mxu0 %v1037
        %1060 = vmatmul.bf16.gmra.mxu0 %v1031
        %v1061 = vpop.f32.mrf.mxu0
        %v1062 = vadd.f32 0.0, %v1061
        %v1063 = vpop.f32.mrf.mxu0
        %1064 = vdwg.mxu0
        %v1065 = vadd.f32 %v1002, %v1049
        %v1066 = vadd.f32 %v1015, %v1062
        %v1067 = vmul.f32 %v918, %v444
        %v1068 = vmul.f32 %v917, %v445
        %s1069 = scalar_lea.vmem %s2, 6
        %v1070 = vld [vmem:[%s1069] sm:$0x3]
        %v1071 = vpack.c.bf16 %v1067, %v1067
        %v1072 = vpack.c.bf16 %v1068, %v1068
        %v1074 = vsel %vm316, %v1070, 0
        %v1077 = vsel %vm320, %v1071, 0
        %v1080 = vsel %vm320, %v1072, 0
        %1082 = vmatpush.bf16.msra.mxu0 0
        %1083 = vmatpush.bf16.msra.mxu0 0
        %1084 = vmatpush.bf16.msra.mxu0 0
        %1085 = vmatpush.bf16.msra.mxu0 0
        %1086 = vmatpush.bf16.msra.mxu0 0
        %1087 = vmatpush.bf16.msra.mxu0 0
        %1088 = vmatpush.bf16.msra.mxu0 0
        %1089 = vmatpush.bf16.msra.mxu0 %v1077
        %1090 = vmatmul.bf16.gmra.mxu0 %v1074
        %v1091 = vpop.f32.mrf.mxu0
        %v1092 = vadd.f32 0.0, %v1091
        %v1093 = vpop.f32.mrf.mxu0
        %1094 = vdwg.mxu0
        %1095 = vmatpush.bf16.msra.mxu0 0
        %1096 = vmatpush.bf16.msra.mxu0 0
        %1097 = vmatpush.bf16.msra.mxu0 0
        %1098 = vmatpush.bf16.msra.mxu0 0
        %1099 = vmatpush.bf16.msra.mxu0 0
        %1100 = vmatpush.bf16.msra.mxu0 0
        %1101 = vmatpush.bf16.msra.mxu0 0
        %1102 = vmatpush.bf16.msra.mxu0 %v1080
        %1103 = vmatmul.bf16.gmra.mxu0 %v1074
        %v1104 = vpop.f32.mrf.mxu0
        %v1105 = vadd.f32 0.0, %v1104
        %v1106 = vpop.f32.mrf.mxu0
        %1107 = vdwg.mxu0
        %v1108 = vadd.f32 %v1065, %v1092
        %v1109 = vadd.f32 %v1066, %v1105
        %s1110 = scalar_lea.vmem %s2, 8
        %v1111 = vld [vmem:[%s1110] sm:$0x3]
        %v1112 = vpack.c.bf16 %v911, %v911
        %v1113 = vpack.c.bf16 %v912, %v912
        %v1115 = vsel %vm316, %v1111, 0
        %v1118 = vsel %vm320, %v1112, 0
        %v1121 = vsel %vm320, %v1113, 0
        %1123 = vmatpush.bf16.msra.mxu0 0
        %1124 = vmatpush.bf16.msra.mxu0 0
        %1125 = vmatpush.bf16.msra.mxu0 0
        %1126 = vmatpush.bf16.msra.mxu0 0
        %1127 = vmatpush.bf16.msra.mxu0 0
        %1128 = vmatpush.bf16.msra.mxu0 0
        %1129 = vmatpush.bf16.msra.mxu0 0
        %1130 = vmatpush.bf16.msra.mxu0 %v1118
        %1131 = vmatmul.bf16.gmra.mxu0 %v1115
        %v1132 = vpop.f32.mrf.mxu0
        %v1133 = vadd.f32 0.0, %v1132
        %v1134 = vpop.f32.mrf.mxu0
        %1135 = vdwg.mxu0
        %1136 = vmatpush.bf16.msra.mxu0 0
        %1137 = vmatpush.bf16.msra.mxu0 0
        %1138 = vmatpush.bf16.msra.mxu0 0
        %1139 = vmatpush.bf16.msra.mxu0 0
        %1140 = vmatpush.bf16.msra.mxu0 0
        %1141 = vmatpush.bf16.msra.mxu0 0
        %1142 = vmatpush.bf16.msra.mxu0 0
        %1143 = vmatpush.bf16.msra.mxu0 %v1121
        %1144 = vmatmul.bf16.gmra.mxu0 %v1115
        %v1145 = vpop.f32.mrf.mxu0
        %v1146 = vadd.f32 0.0, %v1145
        %v1147 = vpop.f32.mrf.mxu0
        %1148 = vdwg.mxu0
        %v1149 = vadd.f32 %v1108, %v1133
        %v1150 = vadd.f32 %v1109, %v1146
        %v1151 = vmul.f32 %v923, %v538
        %v1152 = vmul.f32 %v924, %v539
        %s1153 = scalar_lea.vmem %s2, 10
        %v1154 = vld [vmem:[%s1153] sm:$0x3]
        %v1155 = vpack.c.bf16 %v1151, %v1151
        %v1156 = vpack.c.bf16 %v1152, %v1152
        %v1158 = vsel %vm316, %v1154, 0
        %v1161 = vsel %vm320, %v1155, 0
        %v1164 = vsel %vm320, %v1156, 0
        %1166 = vmatpush.bf16.msra.mxu0 0
        %1167 = vmatpush.bf16.msra.mxu0 0
        %1168 = vmatpush.bf16.msra.mxu0 0
        %1169 = vmatpush.bf16.msra.mxu0 0
        %1170 = vmatpush.bf16.msra.mxu0 0
        %1171 = vmatpush.bf16.msra.mxu0 0
        %1172 = vmatpush.bf16.msra.mxu0 0
        %1173 = vmatpush.bf16.msra.mxu0 %v1161
        %1174 = vmatmul.bf16.gmra.mxu0 %v1158
        %v1175 = vpop.f32.mrf.mxu0
        %v1176 = vadd.f32 0.0, %v1175
        %v1177 = vpop.f32.mrf.mxu0
        %1178 = vdwg.mxu0
        %1179 = vmatpush.bf16.msra.mxu0 0
        %1180 = vmatpush.bf16.msra.mxu0 0
        %1181 = vmatpush.bf16.msra.mxu0 0
        %1182 = vmatpush.bf16.msra.mxu0 0
        %1183 = vmatpush.bf16.msra.mxu0 0
        %1184 = vmatpush.bf16.msra.mxu0 0
        %1185 = vmatpush.bf16.msra.mxu0 0
        %1186 = vmatpush.bf16.msra.mxu0 %v1164
        %1187 = vmatmul.bf16.gmra.mxu0 %v1158
        %v1188 = vpop.f32.mrf.mxu0
        %v1189 = vadd.f32 0.0, %v1188
        %v1190 = vpop.f32.mrf.mxu0
        %1191 = vdwg.mxu0
        %v1192 = vadd.f32 %v1149, %v1176
        %v1193 = vadd.f32 %v1150, %v1189
        %1194 = vrot.lane.b32.xlu0 %v918, 112
        %v1195 = vpop.permute.xlu0 %1194
        %1196 = vrot.lane.b32.xlu0 %v917, 112
        %v1197 = vpop.permute.xlu0 %1196
        %v1198 = vsel %vm589, %v1195, %v1197
        %v1199 = vsel %vm589, %v1197, %v1195
        %v1200 = vmul.f32 %v1198, %v594
        %v1201 = vmul.f32 %v1199, %v595
        %s1202 = scalar_lea.vmem %s2, 12
        %v1203 = vld [vmem:[%s1202] sm:$0x3]
        %v1204 = vpack.c.bf16 %v1200, %v1200
        %v1205 = vpack.c.bf16 %v1201, %v1201
        %v1207 = vsel %vm316, %v1203, 0
        %v1210 = vsel %vm320, %v1204, 0
        %v1213 = vsel %vm320, %v1205, 0
        %1215 = vmatpush.bf16.msra.mxu0 0
        %1216 = vmatpush.bf16.msra.mxu0 0
        %1217 = vmatpush.bf16.msra.mxu0 0
        %1218 = vmatpush.bf16.msra.mxu0 0
        %1219 = vmatpush.bf16.msra.mxu0 0
        %1220 = vmatpush.bf16.msra.mxu0 0
        %1221 = vmatpush.bf16.msra.mxu0 0
        %1222 = vmatpush.bf16.msra.mxu0 %v1210
        %1223 = vmatmul.bf16.gmra.mxu0 %v1207
        %v1224 = vpop.f32.mrf.mxu0
        %v1225 = vadd.f32 0.0, %v1224
        %v1226 = vpop.f32.mrf.mxu0
        %1227 = vdwg.mxu0
        %1228 = vmatpush.bf16.msra.mxu0 0
        %1229 = vmatpush.bf16.msra.mxu0 0
        %1230 = vmatpush.bf16.msra.mxu0 0
        %1231 = vmatpush.bf16.msra.mxu0 0
        %1232 = vmatpush.bf16.msra.mxu0 0
        %1233 = vmatpush.bf16.msra.mxu0 0
        %1234 = vmatpush.bf16.msra.mxu0 0
        %1235 = vmatpush.bf16.msra.mxu0 %v1213
        %1236 = vmatmul.bf16.gmra.mxu0 %v1207
        %v1237 = vpop.f32.mrf.mxu0
        %v1238 = vadd.f32 0.0, %v1237
        %v1239 = vpop.f32.mrf.mxu0
        %1240 = vdwg.mxu0
        %v1241 = vadd.f32 %v1192, %v1225
        %v1242 = vadd.f32 %v1193, %v1238
        %1243 = vrot.lane.b32.xlu0 %v911, 112
        %v1244 = vpop.permute.xlu0 %1243
        %1245 = vrot.lane.b32.xlu0 %v912, 112
        %v1246 = vpop.permute.xlu0 %1245
        %v1247 = vsel %vm589, %v1244, %v1246
        %v1248 = vsel %vm589, %v1246, %v1244
        %v1249 = vmul.f32 %v1247, %v653
        %v1250 = vmul.f32 %v1248, %v654
        %s1251 = scalar_lea.vmem %s2, 14
        %v1252 = vld [vmem:[%s1251] sm:$0x3]
        %v1253 = vpack.c.bf16 %v1249, %v1249
        %v1254 = vpack.c.bf16 %v1250, %v1250
        %v1256 = vsel %vm316, %v1252, 0
        %v1259 = vsel %vm320, %v1253, 0
        %v1262 = vsel %vm320, %v1254, 0
        %1264 = vmatpush.bf16.msra.mxu0 0
        %1265 = vmatpush.bf16.msra.mxu0 0
        %1266 = vmatpush.bf16.msra.mxu0 0
        %1267 = vmatpush.bf16.msra.mxu0 0
        %1268 = vmatpush.bf16.msra.mxu0 0
        %1269 = vmatpush.bf16.msra.mxu0 0
        %1270 = vmatpush.bf16.msra.mxu0 0
        %1271 = vmatpush.bf16.msra.mxu0 %v1259
        %1272 = vmatmul.bf16.gmra.mxu0 %v1256
        %v1273 = vpop.f32.mrf.mxu0
        %v1274 = vadd.f32 0.0, %v1273
        %v1275 = vpop.f32.mrf.mxu0
        %1276 = vdwg.mxu0
        %1277 = vmatpush.bf16.msra.mxu0 0
        %1278 = vmatpush.bf16.msra.mxu0 0
        %1279 = vmatpush.bf16.msra.mxu0 0
        %1280 = vmatpush.bf16.msra.mxu0 0
        %1281 = vmatpush.bf16.msra.mxu0 0
        %1282 = vmatpush.bf16.msra.mxu0 0
        %1283 = vmatpush.bf16.msra.mxu0 0
        %1284 = vmatpush.bf16.msra.mxu0 %v1262
        %1285 = vmatmul.bf16.gmra.mxu0 %v1256
        %v1286 = vpop.f32.mrf.mxu0
        %v1287 = vadd.f32 0.0, %v1286
        %v1288 = vpop.f32.mrf.mxu0
        %1289 = vdwg.mxu0
        %v1290 = vadd.f32 %v1241, %v1274
        %v1291 = vadd.f32 %v1242, %v1287
        %1292 = vrot.lane.b32.xlu0 %v923, 112
        %v1293 = vpop.permute.xlu0 %1292
        %1294 = vrot.lane.b32.xlu0 %v924, 112
        %v1295 = vpop.permute.xlu0 %1294
        %v1296 = vsel %vm589, %v1293, %v1295
        %v1297 = vsel %vm589, %v1295, %v1293
        %v1298 = vmul.f32 %v1296, %v708
        %v1299 = vmul.f32 %v1297, %v709
        %s1300 = scalar_lea.vmem %s2, 16
        %v1301 = vld [vmem:[%s1300] sm:$0x3]
        %v1302 = vpack.c.bf16 %v1298, %v1298
        %v1303 = vpack.c.bf16 %v1299, %v1299
        %v1305 = vsel %vm316, %v1301, 0
        %v1308 = vsel %vm320, %v1302, 0
        %v1311 = vsel %vm320, %v1303, 0
        %1313 = vmatpush.bf16.msra.mxu0 0
        %1314 = vmatpush.bf16.msra.mxu0 0
        %1315 = vmatpush.bf16.msra.mxu0 0
        %1316 = vmatpush.bf16.msra.mxu0 0
        %1317 = vmatpush.bf16.msra.mxu0 0
        %1318 = vmatpush.bf16.msra.mxu0 0
        %1319 = vmatpush.bf16.msra.mxu0 0
        %1320 = vmatpush.bf16.msra.mxu0 %v1308
        %1321 = vmatmul.bf16.gmra.mxu0 %v1305
        %v1322 = vpop.f32.mrf.mxu0
        %v1323 = vadd.f32 0.0, %v1322
        %v1324 = vpop.f32.mrf.mxu0
        %1325 = vdwg.mxu0
        %1326 = vmatpush.bf16.msra.mxu0 0
        %1327 = vmatpush.bf16.msra.mxu0 0
        %1328 = vmatpush.bf16.msra.mxu0 0
        %1329 = vmatpush.bf16.msra.mxu0 0
        %1330 = vmatpush.bf16.msra.mxu0 0
        %1331 = vmatpush.bf16.msra.mxu0 0
        %1332 = vmatpush.bf16.msra.mxu0 0
        %1333 = vmatpush.bf16.msra.mxu0 %v1311
        %1334 = vmatmul.bf16.gmra.mxu0 %v1305
        %v1335 = vpop.f32.mrf.mxu0
        %v1336 = vadd.f32 0.0, %v1335
        %v1337 = vpop.f32.mrf.mxu0
        %1338 = vdwg.mxu0
        %v1339 = vadd.f32 %v1290, %v1323
        %v1340 = vadd.f32 %v1291, %v1336
        %1342 = vset.pattern.permute.xlu0 0
        %1343 = vperm.xlu0 %1342, %v244
        %v1344 = vpop.permute.xlu0 %1343
        %v1346 = vadd.f32 %v1339, %v1344
        %v1347 = vadd.f32 %v1340, %v1344
        %v1348 = vsel %vm762, %v1346, 0.0
        %v1349 = vsel %vm762, %v1347, 0.0
        %v1350 = vadd.f32 %v1348, %v1349
        %1351 = vadd.xlane.f32.xlu0 %v1350
        %v1352 = vpop.xlane.xlu0 %1351
        %v1353 = vmul.f32 %v1352, %v235
        %v1354 = vsel %vm769, %v1353, 0.0
        %1355 = vadd.xlane.f32.xlu0 %v1354
        %v1356 = vpop.xlane.xlu0 %1355
        %v1357 = vrot.slane %v1356, 4
        %v1358 = vadd.f32 %v1356, %v1357
        %v1359 = vrot.slane %v1358, 2
        %v1360 = vadd.f32 %v1358, %v1359
        %v1361 = vrot.slane %v1360, 1
        %v1362 = vadd.f32 %v1360, %v1361
        %s1363 = vtos %v1362
        %v1364 = vstv %s1363
        %v1365 = vmul.f32 %v1352, %v236
        %v1366 = vsel %vm769, %v1365, 0.0
        %1367 = vadd.xlane.f32.xlu0 %v1366
        %v1368 = vpop.xlane.xlu0 %1367
        %v1369 = vrot.slane %v1368, 4
        %v1370 = vadd.f32 %v1368, %v1369
        %v1371 = vrot.slane %v1370, 2
        %v1372 = vadd.f32 %v1370, %v1371
        %v1373 = vrot.slane %v1372, 1
        %v1374 = vadd.f32 %v1372, %v1373
        %s1375 = vtos %v1374
        %v1376 = vstv %s1375
        %v1377 = vmul.f32 %v1364, 0.001953125
        %v1378 = vmul.f32 %v235, %v1377
        %v1379 = vmul.f32 %v1376, 0.001953125
        %v1380 = vmul.f32 %v236, %v1379
        %v1381 = vadd.f32 %v1378, %v1380
        %v1382 = vsub.f32 %v1346, %v1381
        %v1383 = vsub.f32 %v1347, %v1381
        %v1384 = vmul.f32 %v1382, %v1382
        %v1385 = vmul.f32 %v1383, %v1383
        %v1386 = vsel %vm762, %v1384, 0.0
        %v1387 = vsel %vm762, %v1385, 0.0
        %v1388 = vadd.f32 %v1386, %v1387
        %1389 = vadd.xlane.f32.xlu0 %v1388
        %v1390 = vpop.xlane.xlu0 %1389
        %v1391 = vmul.f32 %v1390, %v235
        %v1392 = vsel %vm769, %v1391, 0.0
        %1393 = vadd.xlane.f32.xlu0 %v1392
        %v1394 = vpop.xlane.xlu0 %1393
        %v1395 = vrot.slane %v1394, 4
        %v1396 = vadd.f32 %v1394, %v1395
        %v1397 = vrot.slane %v1396, 2
        %v1398 = vadd.f32 %v1396, %v1397
        %v1399 = vrot.slane %v1398, 1
        %v1400 = vadd.f32 %v1398, %v1399
        %s1401 = vtos %v1400
        %v1402 = vstv %s1401
        %v1403 = vmul.f32 %v1402, 0.001953125
        %v1404 = vmul.f32 %v1390, %v236
        %v1405 = vsel %vm769, %v1404, 0.0
        %1406 = vadd.xlane.f32.xlu0 %v1405
        %v1407 = vpop.xlane.xlu0 %1406
        %v1408 = vrot.slane %v1407, 4
        %v1409 = vadd.f32 %v1407, %v1408
        %v1410 = vrot.slane %v1409, 2
        %v1411 = vadd.f32 %v1409, %v1410
        %v1412 = vrot.slane %v1411, 1
        %v1413 = vadd.f32 %v1411, %v1412
        %s1414 = vtos %v1413
        %v1415 = vstv %s1414
        %v1416 = vmul.f32 %v1415, 0.001953125
        %v1417 = vadd.f32 %v1403, 1e-05
        %v1418 = vrsqrt.pop %v1417
        %v1419 = vmul.f32 %v1418, %v1417
        %v1420 = vmul.f32 %v1419, %v1418
        %v1421 = vmul.f32 0.5, %v1420
        %v1422 = vsub.f32 1.5, %v1421
        %v1423 = vmul.f32 %v1418, %v1422
        %vm1424 = vweird.f32 %v1417
        %vm1425 = vweird.f32 %v1418
        %vm1426 = vmor %vm1424, %vm1425
        %v1427 = vsel %vm1426, %v1418, %v1423
        %v1428 = vmul.f32 %v235, %v1427
        %v1429 = vadd.f32 %v1416, 1e-05
        %v1430 = vrsqrt.pop %v1429
        %v1431 = vmul.f32 %v1430, %v1429
        %v1432 = vmul.f32 %v1431, %v1430
        %v1433 = vmul.f32 0.5, %v1432
        %v1434 = vsub.f32 1.5, %v1433
        %v1435 = vmul.f32 %v1430, %v1434
        %vm1436 = vweird.f32 %v1429
        %vm1437 = vweird.f32 %v1430
        %vm1438 = vmor %vm1436, %vm1437
        %v1439 = vsel %vm1438, %v1430, %v1435
        %v1440 = vmul.f32 %v236, %v1439
        %v1441 = vadd.f32 %v1428, %v1440
        %v1442 = vmul.f32 %v1441, %v246
        %1444 = vset.pattern.permute.xlu0 0
        %1445 = vperm.xlu0 %1444, %v1442
        %v1446 = vpop.permute.xlu0 %1445
        %v1448 = vmul.f32 %v1382, %v1446
        %v1449 = vmul.f32 %v1383, %v1446
        %1451 = vset.pattern.permute.xlu0 0
        %1452 = vperm.xlu0 %1451, %v248
        %v1453 = vpop.permute.xlu0 %1452
        %v1455 = vadd.f32 %v1448, %v1453
        %v1456 = vadd.f32 %v1449, %v1453
        %v1457 = vxor.u32 %v1455, 2147483648
        %v1458 = vxor.u32 %v1456, 2147483648
        %v1459 = vmul.f32 %v1457, 1.442695
        %v1460 = vpow.pop %v1459
        %v1461 = vmul.f32 %v1458, 1.442695
        %v1462 = vpow.pop %v1461
        %v1463 = vadd.f32 %v1460, 1.0
        %v1464 = vadd.f32 %v1462, 1.0
        %v1465 = vrcp.pop %v1463
        %v1466 = vmul.f32 %v1463, %v1465
        %v1467 = vsub.f32 1.0, %v1466
        %v1468 = vmul.f32 %v1465, %v1467
        %v1469 = vadd.f32 %v1465, %v1468
        %vm1470 = vweird.f32 %v1463
        %vm1471 = vweird.f32 %v1465
        %vm1472 = vmor %vm1470, %vm1471
        %v1473 = vsel %vm1472, %v1465, %v1469
        %v1474 = vand.u32 2147483647, %v1463
        %vm1475 = vcmp.eq.f32.partialorder %v1474, 8.507059e+37
        %v1476 = vand.u32 %v1463, 2147483648
        %v1477 = vor.u32 1.1754944e-38, %v1476
        %v1478 = vsel %vm1475, %v1477, %v1473
        %v1479 = vmul.f32 1.0, %v1478
        %v1480 = vrcp.pop %v1464
        %v1481 = vmul.f32 %v1464, %v1480
        %v1482 = vsub.f32 1.0, %v1481
        %v1483 = vmul.f32 %v1480, %v1482
        %v1484 = vadd.f32 %v1480, %v1483
        %vm1485 = vweird.f32 %v1464
        %vm1486 = vweird.f32 %v1480
        %vm1487 = vmor %vm1485, %vm1486
        %v1488 = vsel %vm1487, %v1480, %v1484
        %v1489 = vand.u32 2147483647, %v1464
        %vm1490 = vcmp.eq.f32.partialorder %v1489, 8.507059e+37
        %v1491 = vand.u32 %v1464, 2147483648
        %v1492 = vor.u32 1.1754944e-38, %v1491
        %v1493 = vsel %vm1490, %v1492, %v1488
        %v1494 = vmul.f32 1.0, %v1493
        %v1495 = vmul.f32 %v1455, %v1479
        %v1496 = vmul.f32 %v1456, %v1494
        %v1499 = vrot.slane %v1496, 4
        %v1500 = vsel %vm762, %v1495, %v1499
        %1502 = vst [vmem:[%s217] sm:$0xff] %v1500
        %s1503 = sand.u32 %s137, 1
        %s1504 = scalar_lea.sflag [#allocation3], %s1503
        %s1505 = sand.u32 %s137, 1
        %s1506 = smul.addr %s1505, 8
        %s1507 = scalar_lea.vmem [#allocation2], %s1506
        // Predicated region
        $region41: #{tpu_custom_call.1} parent=39 // pred_check
          %p1508 = pneg %p147
        $region42: #{tpu_custom_call.1} parent=39 // pred_check_branch
          %1510 = sbr.rel (%p1508) target = $region44
        $region43: #{tpu_custom_call.1} parent=39 // pred_region
          %1512 = vsyncadd %s1504, 0
          %s1513 = smul.addr %s19, 2
          %s1514 = smul.addr %s1513, 4
          %s1515 = scalar_lea.hbm %s5, %s1514
          %s1517 = sshll.u32 %s1507, 4
          %s1518 = int_to_ptr.vmem [resolvable:$true] %s1517
          %s1519 = sshll.u32 %s1515, 4
          %s1520 = int_to_ptr.hbm [resolvable:$true] %s1519
          %1522 = dma.vmem_to_hbm [thread:$0]  %s1518, 128, %s1520, %s1504
        $region44: #{tpu_custom_call.1} parent=39 // pred_fallthru
          _
      $region40: #{tpu_custom_call.1} parent=5 // pred_fallthru
        _
      %p1523 = scmp.le.s32.totalorder 2, %s14
      // Predicated region
      $region45: #{tpu_custom_call.1} parent=5 // pred_check
        %p1524 = pneg %p1523
      $region46: #{tpu_custom_call.1} parent=5 // pred_check_branch
        %1526 = sbr.rel (%p1524) target = $region48
      $region47: #{tpu_custom_call.1} parent=5 // pred_region
        %s1527 = ssub.s32 %s14, 2
        // Predicated region
        $region49: #{tpu_custom_call.1} parent=47 // pred_check
          %p1528 = pneg %p153
        $region50: #{tpu_custom_call.1} parent=47 // pred_check_branch
          %1530 = sbr.rel (%p1528) target = $region52
        $region51: #{tpu_custom_call.1} parent=47 // pred_region
          %s1531 = sand.u32 %s138, 1
          %s1532 = scalar_lea.sflag [#allocation3], %s1531
          %s1533 = sand.u32 %s138, 1
          %s1534 = smul.addr %s1533, 8
          %s1535 = scalar_lea.vmem [#allocation2], %s1534
          %1537 = dma.done %s1532, 128
        $region52: #{tpu_custom_call.1} parent=47 // pred_fallthru
          _
      $region48: #{tpu_custom_call.1} parent=5 // pred_fallthru
        _
    $region6: #{tpu_custom_call.1} parent=1 // loop_footer
      %s18 = sadd.s32 1, %s14
    $region7: #{tpu_custom_call.1} parent=1 // loop_footer_branch
      %13 = sbr.rel target = $region3
    $region8: #{tpu_custom_call.1} parent=1 // loop_exit
      _
    %1538 = vsyncpa [#allocation3], 1
    %s1539 = scalar_lea.sflag [#allocation3], 1
    %1540 = vsyncpa %s1539, 1

</llo_original>
